<compile_context>
chip_gen: v7x
topology: tpu7x:2x2x1
jax: 0.10.0
libtpu: 0.0.40
codegen_flags: <defaults>
</compile_context>

<pallas_src>
import functools

import numpy as np

import jax
import jax.numpy as jnp
from jax.experimental import pallas as pl
from jax.experimental.pallas import tpu as pltpu

VMEM_SPEC = pl.BlockSpec(memory_space=pltpu.MemorySpace.VMEM)
BN_EPS = 1e-5


def _round_up(x, m):
    return ((x + m - 1) // m) * m


# ----------------------------------------------------------------------------
# Fused Pallas kernel: conv3x3(+bias)+ReLU+GAP backbone -> Linear+BN+ReLU -> Linear
# ----------------------------------------------------------------------------
def _ssl_fused_kernel(lhs_ref, wslab_ref, pool_ref, pslab_ref, out_ref,
                      *, kc, cout, hid):
    # (1) conv3x3 SAME (+bias via the ones column) as ONE im2col matmul,
    #     bf16 inputs / f32 accumulation, ReLU fused on the result.
    act = jnp.maximum(
        jnp.dot(lhs_ref[...], wslab_ref[0:kc, 0:cout],
                preferred_element_type=jnp.float32), 0.0)           # (rows, cout) f32

    # (2) global average pool as an MXU matmul; pool rows select each image's rows.
    rep = jnp.dot(pool_ref[...], act.astype(jnp.bfloat16),
                  preferred_element_type=jnp.float32)                # (N, cout) f32

    # (3) projector[0]: Linear + BatchNorm1d (training-mode batch stats) + ReLU,
    #     folded to one FMA epilogue. Kept f32: the batch-of-2 BN divides by
    #     |z0-z1|/2 (floored by sqrt(eps)) and would amplify bf16 rounding here.
    w1 = pslab_ref[0:cout, :]
    b1 = pslab_ref[cout:cout + 1, :]
    g1 = pslab_ref[cout + 1:cout + 2, :]
    bt1 = pslab_ref[cout + 2:cout + 3, :]
    z = jnp.dot(rep, w1, preferred_element_type=jnp.float32) + b1
    mean = jnp.mean(z, axis=0, keepdims=True)
    var = jnp.mean((z - mean) ** 2, axis=0, keepdims=True)           # biased var (PyTorch)
    scale = g1 * jax.lax.rsqrt(var + BN_EPS)
    shift = bt1 - mean * scale
    h1 = jnp.maximum(z * scale + shift, 0.0)                         # (N, hid)

    # (4) projector[1]: Linear(hid, proj, bias=False); bf16 in / f32 acc. w2 was
    #     lane-padded to the slab width on the host, so its tail columns are zero
    #     and double as output padding.
    h2p = jnp.dot(h1.astype(jnp.bfloat16), wslab_ref[kc:kc + hid, :],
                  preferred_element_type=jnp.float32)                # (N, slab_w)

    # (5) pack rep | h1 | h2(+zeros) into one lane-dense slab -> single store.
    pieces = [rep, h1, h2p]
    used = cout + hid + h2p.shape[1]
    pad_w = out_ref.shape[1] - used
    if pad_w:
        pieces.append(jnp.zeros((rep.shape[0], pad_w), jnp.float32))
    out_ref[...] = jnp.concatenate(pieces, axis=-1)


# ----------------------------------------------------------------------------
# Parameters & forward
# ----------------------------------------------------------------------------
def init_params(key, cin=3, c_stem=32, hidden=64, proj=16):
    ks = jax.random.split(key, 5)
    return {
        # backbone stem (stand-in for the torchvision net)
        "conv_w": 0.1 * jax.random.normal(ks[0], (c_stem, cin, 3, 3), jnp.float32),
        "conv_b": 0.01 * jax.random.normal(ks[1], (c_stem,), jnp.float32),
        # projector[0]: Linear(R=c_stem, hidden) + BN(hidden) + ReLU
        "w1": jax.random.normal(ks[2], (c_stem, hidden), jnp.float32) / jnp.sqrt(c_stem),
        "b1": 0.01 * jax.random.normal(ks[3], (hidden,), jnp.float32),
        "gamma1": jnp.ones((hidden,), jnp.float32),
        "beta1": jnp.zeros((hidden,), jnp.float32),
        # projector[1]: Linear(hidden, proj, bias=False)
        "w2": jax.random.normal(ks[4], (hidden, proj), jnp.float32) / jnp.sqrt(hidden),
    }


def ssl_network_forward(params, inputs, embedding=False):
    """Mirrors SSLNetwork.forward(inputs, embedding, predictor=False), loss='barlow'."""
    x = inputs.astype(jnp.float32)
    n, cin, h, w = x.shape
    cout = params["conv_w"].shape[0]
    hid = params["w1"].shape[1]
    proj = params["w2"].shape[1]

    rows = n * h * w
    kc = _round_up(9 * cin + 1, 16)             # conv contraction: 27 taps + bias -> 32
    slab_w = max(cout, proj)                    # shared lane width of the bf16 weight slab
    out_w = _round_up(cout + hid + slab_w, 128)  # lane-dense packed output width (128)

    # --- host glue (tiny; the patches producer may fuse into the pallas operand) ---
    # im2col of the 3x3 SAME conv + a ones column that folds the conv bias in.
    xp = jnp.pad(jnp.transpose(x, (0, 2, 3, 1)), ((0, 0), (1, 1), (1, 1), (0, 0)))
    taps = [xp[:, dy:dy + h, dx:dx + w, :] for dy in range(3) for dx in range(3)]
    patches = jnp.concatenate(taps, axis=-1).reshape(rows, 9 * cin)
    lhs = jnp.concatenate([patches, jnp.ones((rows, 1), jnp.float32)], axis=-1)
    lhs = jnp.pad(lhs, ((0, 0), (0, kc - (9 * cin + 1)))).astype(jnp.bfloat16)

    # bf16 weight slab: [conv weights in (kh, kw, ci) order + bias row ; w2 lane-padded]
    cw = jnp.transpose(params["conv_w"], (2, 3, 1, 0)).reshape(9 * cin, cout)
    cw = jnp.concatenate([cw, params["conv_b"].reshape(1, cout)], axis=0)
    cw = jnp.pad(cw, ((0, kc - (9 * cin + 1)), (0, slab_w - cout)))
    w2p = jnp.pad(params["w2"], ((0, 0), (0, slab_w - proj)))
    wslab = jnp.concatenate([cw, w2p], axis=0).astype(jnp.bfloat16)   # (kc+hid, slab_w)

    # f32 param slab: w1 rows, then b1 / gamma1 / beta1 rows.
    pslab = jnp.concatenate(
        [params["w1"].astype(jnp.float32),
         params["b1"].reshape(1, hid),
         params["gamma1"].reshape(1, hid),
         params["beta1"].reshape(1, hid)], axis=0)                    # (cout+3, hid)

    # Block-mean pooling matrix as a trace-time numpy constant (fixes the tracer leak
    # from the previous lru_cache'd jnp version). 1/(h*w) = 1/256 is exact in bf16.
    pool_np = np.kron(np.eye(n, dtype=np.float32),
                      np.ones((1, h * w), np.float32)) / float(h * w)
    pool = jnp.asarray(pool_np, dtype=jnp.bfloat16)                   # (N, rows)

    # Let XLA fuse the im2col producer into the patches operand (review #7); guarded
    # in case this CompilerParams field is unavailable in the running JAX version.
    try:
        compiler_params = pltpu.CompilerParams(
            allow_input_fusion=[True, False, False, False])
    except TypeError:
        compiler_params = pltpu.CompilerParams()

    kernel = functools.partial(_ssl_fused_kernel, kc=kc, cout=cout, hid=hid)

    packed = pl.pallas_call(
        kernel,
        out_shape=jax.ShapeDtypeStruct((n, out_w), jnp.float32),
        in_specs=[VMEM_SPEC] * 4,
        out_specs=VMEM_SPEC,
        compiler_params=compiler_params,
    )(lhs, wslab, pool, pslab)

    representation = packed[:, :cout]
    if embedding:
        return representation
    h1 = packed[:, cout:cout + hid]
    h2 = packed[:, cout + hid:cout + hid + proj]
    embeddings = h2                                   # projector(representation)
    list_outputs = [representation, h1, h2]           # detach() is a no-op for values
    return embeddings, list_outputs


def _reference_forward(params, inputs):
    """Plain-JAX f32 reference for the numerical check (also returns pre-BN z)."""
    y = jax.lax.conv_general_dilated(
        inputs.astype(jnp.float32), params["conv_w"], (1, 1), "SAME",
        dimension_numbers=("NCHW", "OIHW", "NCHW"))
    y = jnp.maximum(y + params["conv_b"][None, :, None, None], 0.0)
    rep = jnp.mean(y, axis=(2, 3))
    z = rep @ params["w1"] + params["b1"]
    mu = z.mean(0, keepdims=True)
    var = ((z - mu) ** 2).mean(0, keepdims=True)
    h1 = jnp.maximum((z - mu) / jnp.sqrt(var + BN_EPS) * params["gamma1"]
                     + params["beta1"], 0.0)
    h2 = h1 @ params["w2"]
    return h2, [rep, h1, h2], z


if __name__ == "__main__":
    key = jax.random.PRNGKey(0)
    k_x, k_p = jax.random.split(key)
    x = jax.random.normal(k_x, (2, 3, 16, 16), jnp.float32)   # NCHW, like PyTorch
    params = init_params(k_p)

    fwd = jax.jit(ssl_network_forward, static_argnames=("embedding",))

    embeddings, list_outputs = fwd(params, x, embedding=False)
    jax.block_until_ready(embeddings)
    for o in list_outputs:
        jax.block_until_ready(o)

    ref_emb, ref_list, ref_z = _reference_forward(params, x)
    rep_k, h1_k, h2_k = list_outputs

    assert embeddings.shape == (2, 16)
    assert [tuple(o.shape) for o in list_outputs] == [(2, 32), (2, 64), (2, 16)]

    # representation: plain bf16-input / f32-accumulate error -> tight check.
    assert jnp.allclose(rep_k, ref_list[0], atol=1e-2, rtol=1e-2)

    # h1: BatchNorm over a batch of 2 normalizes each feature by |z0-z1|/2 (floored by
    # sqrt(eps)), i.e. it is ~sign(z0-z1); features with a near-tie are genuinely
    # ill-conditioned (gain up to ~1/(2*sqrt(eps)) ~= 158), so check those only coarsely.
    well_cond = jnp.abs(ref_z[0] - ref_z[1]) > 5e-2
    assert jnp.allclose(jnp.where(well_cond, h1_k, 0.0),
                        jnp.where(well_cond, ref_list[1], 0.0), atol=2e-2, rtol=2e-2)
    assert float(jnp.max(jnp.abs(h1_k - ref_list[1]))) < 0.3

    # h2 / embeddings: ill-conditioned h1 features enter with weight ~1/sqrt(hid).
    assert jnp.allclose(h2_k, ref_list[2], atol=3e-2, rtol=3e-2)
    assert jnp.allclose(embeddings, ref_emb, atol=3e-2, rtol=3e-2)

    # embedding=True path (returns just the backbone representation)
    rep_only = fwd(params, x, embedding=True)
    jax.block_until_ready(rep_only)
    assert jnp.allclose(rep_only, ref_list[0], atol=1e-2, rtol=1e-2)

    print("KERNEL_OK")
</pallas_src>

<mosaic_0001>
module attributes {stable_mosaic.version = 11 : i64} {
  func.func @_ssl_fused_kernel(%arg0: memref<512x32xbf16, #tpu.memory_space<vmem>>, %arg1: memref<96x32xbf16, #tpu.memory_space<vmem>>, %arg2: memref<2x512xbf16, #tpu.memory_space<vmem>>, %arg3: memref<35x64xf32, #tpu.memory_space<vmem>>, %arg4: memref<2x128xf32, #tpu.memory_space<vmem>>) attributes {dimension_semantics = [], scalar_prefetch = 0 : i64, scratch_operands = 0 : i64, tpu.core_type = #tpu.core_type<tc>} {
    %c0 = arith.constant 0 : index
    %c0_0 = arith.constant 0 : index
    %0 = vector.load %arg0[%c0, %c0_0] : memref<512x32xbf16, #tpu.memory_space<vmem>>, vector<512x32xbf16>
    %c0_1 = arith.constant 0 : index
    %c0_2 = arith.constant 0 : index
    %1 = vector.load %arg1[%c0_1, %c0_2] : memref<96x32xbf16, #tpu.memory_space<vmem>>, vector<32x32xbf16>
    %cst = arith.constant dense<0.000000e+00> : vector<512x32xf32>
    %2 = tpu.matmul %0, %1, %cst {dimension_numbers = #tpu.dot_dimension_numbers<[1], [0], [0], [1], [0, 0, 1, 1], [], []>} : vector<512x32xbf16>, vector<32x32xbf16>, vector<512x32xf32> -> vector<512x32xf32>
    %cst_3 = arith.constant 0.000000e+00 : f32
    %3 = vector.broadcast %cst_3 : f32 to vector<512x32xf32>
    %4 = arith.maximumf %2, %3 : vector<512x32xf32>
    %c0_4 = arith.constant 0 : index
    %c0_5 = arith.constant 0 : index
    %5 = vector.load %arg2[%c0_4, %c0_5] : memref<2x512xbf16, #tpu.memory_space<vmem>>, vector<2x512xbf16>
    %6 = arith.truncf %4 : vector<512x32xf32> to vector<512x32xbf16>
    %cst_6 = arith.constant dense<0.000000e+00> : vector<2x32xf32>
    %7 = tpu.matmul %5, %6, %cst_6 {dimension_numbers = #tpu.dot_dimension_numbers<[1], [0], [0], [1], [0, 0, 1, 1], [], []>} : vector<2x512xbf16>, vector<512x32xbf16>, vector<2x32xf32> -> vector<2x32xf32>
    %c0_7 = arith.constant 0 : index
    %c0_8 = arith.constant 0 : index
    %8 = vector.load %arg3[%c0_7, %c0_8] : memref<35x64xf32, #tpu.memory_space<vmem>>, vector<32x64xf32>
    %c32 = arith.constant 32 : index
    %c0_9 = arith.constant 0 : index
    %9 = vector.load %arg3[%c32, %c0_9] : memref<35x64xf32, #tpu.memory_space<vmem>>, vector<1x64xf32>
    %c33 = arith.constant 33 : index
    %c0_10 = arith.constant 0 : index
    %10 = vector.load %arg3[%c33, %c0_10] : memref<35x64xf32, #tpu.memory_space<vmem>>, vector<1x64xf32>
    %c34 = arith.constant 34 : index
    %c0_11 = arith.constant 0 : index
    %11 = vector.load %arg3[%c34, %c0_11] : memref<35x64xf32, #tpu.memory_space<vmem>>, vector<1x64xf32>
    %cst_12 = arith.constant dense<0.000000e+00> : vector<2x64xf32>
    %12 = tpu.matmul %7, %8, %cst_12 {dimension_numbers = #tpu.dot_dimension_numbers<[1], [0], [0], [1], [0, 0, 1, 1], [], []>} : vector<2x32xf32>, vector<32x64xf32>, vector<2x64xf32> -> vector<2x64xf32>
    %13 = vector.broadcast %9 : vector<1x64xf32> to vector<2x64xf32>
    %14 = arith.addf %12, %13 : vector<2x64xf32>
    %cst_13 = arith.constant dense<0.000000e+00> : vector<64xf32>
    %15 = vector.multi_reduction <add>, %14, %cst_13 [0] : vector<2x64xf32> to vector<64xf32>
    %16 = vector.shape_cast %15 : vector<64xf32> to vector<1x64xf32>
    %cst_14 = arith.constant 2.000000e+00 : f32
    %17 = vector.broadcast %cst_14 : f32 to vector<1x64xf32>
    %18 = arith.divf %16, %17 : vector<1x64xf32>
    %19 = vector.broadcast %18 : vector<1x64xf32> to vector<2x64xf32>
    %20 = arith.subf %14, %19 : vector<2x64xf32>
    %21 = arith.mulf %20, %20 : vector<2x64xf32>
    %cst_15 = arith.constant dense<0.000000e+00> : vector<64xf32>
    %22 = vector.multi_reduction <add>, %21, %cst_15 [0] : vector<2x64xf32> to vector<64xf32>
    %23 = vector.shape_cast %22 : vector<64xf32> to vector<1x64xf32>
    %cst_16 = arith.constant 2.000000e+00 : f32
    %24 = vector.broadcast %cst_16 : f32 to vector<1x64xf32>
    %25 = arith.divf %23, %24 : vector<1x64xf32>
    %cst_17 = arith.constant 9.99999974E-6 : f32
    %26 = vector.broadcast %cst_17 : f32 to vector<1x64xf32>
    %27 = arith.addf %25, %26 : vector<1x64xf32>
    %28 = math.rsqrt %27 : vector<1x64xf32>
    %29 = arith.mulf %10, %28 : vector<1x64xf32>
    %30 = arith.mulf %18, %29 : vector<1x64xf32>
    %31 = arith.subf %11, %30 : vector<1x64xf32>
    %32 = vector.broadcast %29 : vector<1x64xf32> to vector<2x64xf32>
    %33 = arith.mulf %14, %32 : vector<2x64xf32>
    %34 = vector.broadcast %31 : vector<1x64xf32> to vector<2x64xf32>
    %35 = arith.addf %33, %34 : vector<2x64xf32>
    %cst_18 = arith.constant 0.000000e+00 : f32
    %36 = vector.broadcast %cst_18 : f32 to vector<2x64xf32>
    %37 = arith.maximumf %35, %36 : vector<2x64xf32>
    %38 = arith.truncf %37 : vector<2x64xf32> to vector<2x64xbf16>
    %c32_19 = arith.constant 32 : index
    %c0_20 = arith.constant 0 : index
    %39 = vector.load %arg1[%c32_19, %c0_20] : memref<96x32xbf16, #tpu.memory_space<vmem>>, vector<64x32xbf16>
    %cst_21 = arith.constant dense<0.000000e+00> : vector<2x32xf32>
    %40 = tpu.matmul %38, %39, %cst_21 {dimension_numbers = #tpu.dot_dimension_numbers<[1], [0], [0], [1], [0, 0, 1, 1], [], []>} : vector<2x64xbf16>, vector<64x32xbf16>, vector<2x32xf32> -> vector<2x32xf32>
    %41 = tpu.concatenate %7, %37, %40 in 1 : vector<2x32xf32>, vector<2x64xf32>, vector<2x32xf32> -> vector<2x128xf32>
    %c0_22 = arith.constant 0 : index
    %c0_23 = arith.constant 0 : index
    %42 = vector.load %arg4[%c0_22, %c0_23] : memref<2x128xf32, #tpu.memory_space<vmem>>, vector<2x128xf32>
    tpu.vector_store %arg4[%c0_22, %c0_23], %41 {strides = array<i32>} : memref<2x128xf32, #tpu.memory_space<vmem>>, vector<2x128xf32>,
    return
  }
}

</mosaic_0001>

<llo_original>
// kernel: ssl_network_forward.2
$region0: #{ssl_network_forward.2}
  #allocation0 [shape = 'u32[]', space=smem, size = 0x4, offset = 0x4, fixed_abs, tag = 'smem constant byte address 0x4 - core index']
  #allocation1 [shape = 'u32[144,128]{1,0:T(1,128)}', space=vmem, size = 0x12000, scoped, tag = 'internal scratch']
  #allocation2 [shape = 'u32[2048]{0}', space=vmem, size = 0x2000, scoped, tag = 'scoped memory for ssl_network_forward.2']
  #allocation3 [shape = 'u32[2048]{0}', space=vmem, size = 0x2000, scoped, tag = 'scoped memory for ssl_network_forward.2']
  #allocation4 [shape = 'u32[2048]{0}', space=vmem, size = 0x2000, scoped, tag = 'scoped memory for ssl_network_forward.2']
  #allocation5 [shape = 'u32[2048]{0}', space=vmem, size = 0x2000, scoped, tag = 'scoped memory for ssl_network_forward.2']
  #allocation6 [shape = 'u32[2048]{0}', space=vmem, size = 0x2000, scoped, tag = 'scoped memory for ssl_network_forward.2']
  %s0 = inlined_call_operand.vmem [shape: bf16[96,32], index: 0, kind: input, shape index: {}]
  %s1 = inlined_call_operand.vmem [shape: bf16[2,512], index: 1, kind: input, shape index: {}]
  %s2 = inlined_call_operand.vmem [shape: f32[35,64], index: 2, kind: input, shape index: {}]
  %s3 = inlined_call_operand.<no memory space> [shape: s32[], index: 3, kind: input, shape index: {}]
  %s4 = inlined_call_operand.vmem [shape: bf16[512,27], index: 4, kind: input, shape index: {}]
  %s5 = inlined_call_operand.<no memory space> [shape: bf16[], index: 5, kind: input, shape index: {}]
  %s6 = inlined_call_operand.<no memory space> [shape: bf16[], index: 6, kind: input, shape index: {}]
  %s7 = inlined_call_operand.vmem [shape: f32[2,128], index: 7, kind: output, shape index: {}]
  %s8 = sld [smem:[#allocation0]]
  $region26: #{ssl_network_forward.2} parent=0
    _
  %s10 = ssub.s32 1, %s8
  %s11 = scalar_select 0, %s10, %s8
  %v12 = vstv %s3
  %v13 = vstv %s5
  %v14 = vunpack.i.l.bf16 %v13
  %v16 = vunpack.i.h.bf16 %v13
  %v18 = vstv %s6
  %v19 = vunpack.i.l.bf16 %v18
  %v21 = vunpack.i.h.bf16 %v18
  $region1: #{ssl_network_forward.2} parent=0
    #allocation7 [shape = 'u8[131072]{0}', space=vmem, size = 0x20000, dematerialized = true, scoped, tag = 'FusionAdapter Buffer %fusion.2 = bf16[512,32]{1,0:T(8,128)(2,1)} fusion(%param_3.5, %param_4.2, %param_5.3, %param_6.1), kind=kLoop, calls=%fused_computation.1.clone.clone, metadata={op_name="jit(ssl_network_forward)/jit(_pad)/pad" stack_frame_id=13}']
    // Predicated region
    $region2: #{ssl_network_forward.2} parent=1 // pred_check
      _
    $region3: #{ssl_network_forward.2} parent=1 // pred_check_branch
      %24 = sbr.rel (0) target = $region5
    $region4: #{ssl_network_forward.2} parent=1 // pred_region
      _
    $region5: #{ssl_network_forward.2} parent=1 // pred_fallthru
      _
    // Predicated region
    $region6: #{ssl_network_forward.2} parent=1 // pred_check
      _
    $region7: #{ssl_network_forward.2} parent=1 // pred_check_branch
      %26 = sbr.rel (0) target = $region9
    $region8: #{ssl_network_forward.2} parent=1 // pred_region
      _
    $region9: #{ssl_network_forward.2} parent=1 // pred_fallthru
      _
    // Predicated region
    $region10: #{ssl_network_forward.2} parent=1 // pred_check
      _
    $region11: #{ssl_network_forward.2} parent=1 // pred_check_branch
      %28 = sbr.rel (0) target = $region13
    $region12: #{ssl_network_forward.2} parent=1 // pred_region
      _
    $region13: #{ssl_network_forward.2} parent=1 // pred_fallthru
      _
    // Predicated region
    $region14: #{ssl_network_forward.2} parent=1 // pred_check
      _
    $region15: #{ssl_network_forward.2} parent=1 // pred_check_branch
      %30 = sbr.rel (0) target = $region17
    $region16: #{ssl_network_forward.2} parent=1 // pred_region
      _
    $region17: #{ssl_network_forward.2} parent=1 // pred_fallthru
      _
    %s32 = sor.u32 255, 127
    %s33 = sand.u32 %s32, 85
    %s34 = sshrl.u32 %s33, 1
    %s35 = sor.u32 %s33, %s34
    %s36 = sand.u32 51, %s35
    %s37 = sshrl.u32 %s36, 2
    %s38 = sor.u32 %s36, %s37
    %s39 = sand.u32 15, %s38
    %v40 = vld [vmem:[%s4] sm:%s39]
    %v41 = vunpack.c.l.bf16 %v40
    %v42 = vunpack.c.h.bf16 %v40
    %v43 = vlaneseq
    %v44 = vand.u32 %v43, 127
    %vm46 = vcmp.lt.s32.totalorder %v44, 27
    %v47 = vsel %vm46, %v41, %v14
    %v48 = vlaneseq
    %v49 = vand.u32 %v48, 127
    %52 = xla_tuple %v49, %v12
    %53 = xla_tuple %52
    %vm54 = vcmp.lt.s32.totalorder %v49, %v12
    %v55 = vsel %vm54, 1, 0
    %56 = xla_tuple %v55
    %57 = xla_tuple %v55, %v47, %v19
    %58 = xla_tuple %57
    %v59 = vsel %vm54, %v47, %v19
    %60 = xla_tuple %v59
    %v61 = vpack.c.bf16 0.0, %v59
    %63 = vst [vmem:[#allocation7] sm:$0xf] %v61
    %s64 = scalar_lea.vmem %s4, 4
    %s66 = sor.u32 255, 127
    %s67 = sand.u32 %s66, 85
    %s68 = sshrl.u32 %s67, 1
    %s69 = sor.u32 %s67, %s68
    %s70 = sand.u32 51, %s69
    %s71 = sshrl.u32 %s70, 2
    %s72 = sor.u32 %s70, %s71
    %s73 = sand.u32 15, %s72
    %v74 = vld [vmem:[%s64] sm:%s73]
    %v75 = vunpack.c.l.bf16 %v74
    %v76 = vunpack.c.h.bf16 %v74
    %v77 = vlaneseq
    %v78 = vand.u32 %v77, 127
    %vm80 = vcmp.lt.s32.totalorder %v78, 27
    %v81 = vsel %vm80, %v75, %v14
    %v82 = vlaneseq
    %v83 = vand.u32 %v82, 127
    %86 = xla_tuple %v83, %v12
    %87 = xla_tuple %86
    %vm88 = vcmp.lt.s32.totalorder %v83, %v12
    %v89 = vsel %vm88, 1, 0
    %90 = xla_tuple %v89
    %91 = xla_tuple %v89, %v81, %v19
    %92 = xla_tuple %91
    %v93 = vsel %vm88, %v81, %v19
    %94 = xla_tuple %v93
    %s95 = scalar_lea.vmem [#allocation7], 4
    %v96 = vpack.c.bf16 0.0, %v93
    %98 = vst [vmem:[%s95] sm:$0xf] %v96
    %s99 = scalar_lea.vmem %s4, 8
    %s101 = sor.u32 255, 127
    %s102 = sand.u32 %s101, 85
    %s103 = sshrl.u32 %s102, 1
    %s104 = sor.u32 %s102, %s103
    %s105 = sand.u32 51, %s104
    %s106 = sshrl.u32 %s105, 2
    %s107 = sor.u32 %s105, %s106
    %s108 = sand.u32 15, %s107
    %v109 = vld [vmem:[%s99] sm:%s108]
    %v110 = vunpack.c.l.bf16 %v109
    %v111 = vunpack.c.h.bf16 %v109
    %v112 = vlaneseq
    %v113 = vand.u32 %v112, 127
    %vm115 = vcmp.lt.s32.totalorder %v113, 27
    %v116 = vsel %vm115, %v110, %v14
    %v117 = vlaneseq
    %v118 = vand.u32 %v117, 127
    %121 = xla_tuple %v118, %v12
    %122 = xla_tuple %121
    %vm123 = vcmp.lt.s32.totalorder %v118, %v12
    %v124 = vsel %vm123, 1, 0
    %125 = xla_tuple %v124
    %126 = xla_tuple %v124, %v116, %v19
    %127 = xla_tuple %126
    %v128 = vsel %vm123, %v116, %v19
    %129 = xla_tuple %v128
    %s130 = scalar_lea.vmem [#allocation7], 8
    %v131 = vpack.c.bf16 0.0, %v128
    %133 = vst [vmem:[%s130] sm:$0xf] %v131
    %s134 = scalar_lea.vmem %s4, 12
    %s136 = sor.u32 255, 127
    %s137 = sand.u32 %s136, 85
    %s138 = sshrl.u32 %s137, 1
    %s139 = sor.u32 %s137, %s138
    %s140 = sand.u32 51, %s139
    %s141 = sshrl.u32 %s140, 2
    %s142 = sor.u32 %s140, %s141
    %s143 = sand.u32 15, %s142
    %v144 = vld [vmem:[%s134] sm:%s143]
    %v145 = vunpack.c.l.bf16 %v144
    %v146 = vunpack.c.h.bf16 %v144
    %v147 = vlaneseq
    %v148 = vand.u32 %v147, 127
    %vm150 = vcmp.lt.s32.totalorder %v148, 27
    %v151 = vsel %vm150, %v145, %v14
    %v152 = vlaneseq
    %v153 = vand.u32 %v152, 127
    %156 = xla_tuple %v153, %v12
    %157 = xla_tuple %156
    %vm158 = vcmp.lt.s32.totalorder %v153, %v12
    %v159 = vsel %vm158, 1, 0
    %160 = xla_tuple %v159
    %161 = xla_tuple %v159, %v151, %v19
    %162 = xla_tuple %161
    %v163 = vsel %vm158, %v151, %v19
    %164 = xla_tuple %v163
    %s165 = scalar_lea.vmem [#allocation7], 12
    %v166 = vpack.c.bf16 0.0, %v163
    %168 = vst [vmem:[%s165] sm:$0xf] %v166
    %s169 = scalar_lea.vmem %s4, 16
    %s171 = sor.u32 255, 127
    %s172 = sand.u32 %s171, 85
    %s173 = sshrl.u32 %s172, 1
    %s174 = sor.u32 %s172, %s173
    %s175 = sand.u32 51, %s174
    %s176 = sshrl.u32 %s175, 2
    %s177 = sor.u32 %s175, %s176
    %s178 = sand.u32 15, %s177
    %v179 = vld [vmem:[%s169] sm:%s178]
    %v180 = vunpack.c.l.bf16 %v179
    %v181 = vunpack.c.h.bf16 %v179
    %v182 = vlaneseq
    %v183 = vand.u32 %v182, 127
    %vm185 = vcmp.lt.s32.totalorder %v183, 27
    %v186 = vsel %vm185, %v180, %v14
    %v187 = vlaneseq
    %v188 = vand.u32 %v187, 127
    %191 = xla_tuple %v188, %v12
    %192 = xla_tuple %191
    %vm193 = vcmp.lt.s32.totalorder %v188, %v12
    %v194 = vsel %vm193, 1, 0
    %195 = xla_tuple %v194
    %196 = xla_tuple %v194, %v186, %v19
    %197 = xla_tuple %196
    %v198 = vsel %vm193, %v186, %v19
    %199 = xla_tuple %v198
    %s200 = scalar_lea.vmem [#allocation7], 16
    %v201 = vpack.c.bf16 0.0, %v198
    %203 = vst [vmem:[%s200] sm:$0xf] %v201
    %s204 = scalar_lea.vmem %s4, 20
    %s206 = sor.u32 255, 127
    %s207 = sand.u32 %s206, 85
    %s208 = sshrl.u32 %s207, 1
    %s209 = sor.u32 %s207, %s208
    %s210 = sand.u32 51, %s209
    %s211 = sshrl.u32 %s210, 2
    %s212 = sor.u32 %s210, %s211
    %s213 = sand.u32 15, %s212
    %v214 = vld [vmem:[%s204] sm:%s213]
    %v215 = vunpack.c.l.bf16 %v214
    %v216 = vunpack.c.h.bf16 %v214
    %v217 = vlaneseq
    %v218 = vand.u32 %v217, 127
    %vm220 = vcmp.lt.s32.totalorder %v218, 27
    %v221 = vsel %vm220, %v215, %v14
    %v222 = vlaneseq
    %v223 = vand.u32 %v222, 127
    %226 = xla_tuple %v223, %v12
    %227 = xla_tuple %226
    %vm228 = vcmp.lt.s32.totalorder %v223, %v12
    %v229 = vsel %vm228, 1, 0
    %230 = xla_tuple %v229
    %231 = xla_tuple %v229, %v221, %v19
    %232 = xla_tuple %231
    %v233 = vsel %vm228, %v221, %v19
    %234 = xla_tuple %v233
    %s235 = scalar_lea.vmem [#allocation7], 20
    %v236 = vpack.c.bf16 0.0, %v233
    %238 = vst [vmem:[%s235] sm:$0xf] %v236
    %s239 = scalar_lea.vmem %s4, 24
    %s241 = sor.u32 255, 127
    %s242 = sand.u32 %s241, 85
    %s243 = sshrl.u32 %s242, 1
    %s244 = sor.u32 %s242, %s243
    %s245 = sand.u32 51, %s244
    %s246 = sshrl.u32 %s245, 2
    %s247 = sor.u32 %s245, %s246
    %s248 = sand.u32 15, %s247
    %v249 = vld [vmem:[%s239] sm:%s248]
    %v250 = vunpack.c.l.bf16 %v249
    %v251 = vunpack.c.h.bf16 %v249
    %v252 = vlaneseq
    %v253 = vand.u32 %v252, 127
    %vm255 = vcmp.lt.s32.totalorder %v253, 27
    %v256 = vsel %vm255, %v250, %v14
    %v257 = vlaneseq
    %v258 = vand.u32 %v257, 127
    %261 = xla_tuple %v258, %v12
    %262 = xla_tuple %261
    %vm263 = vcmp.lt.s32.totalorder %v258, %v12
    %v264 = vsel %vm263, 1, 0
    %265 = xla_tuple %v264
    %266 = xla_tuple %v264, %v256, %v19
    %267 = xla_tuple %266
    %v268 = vsel %vm263, %v256, %v19
    %269 = xla_tuple %v268
    %s270 = scalar_lea.vmem [#allocation7], 24
    %v271 = vpack.c.bf16 0.0, %v268
    %273 = vst [vmem:[%s270] sm:$0xf] %v271
    %s274 = scalar_lea.vmem %s4, 28
    %s276 = sor.u32 255, 127
    %s277 = sand.u32 %s276, 85
    %s278 = sshrl.u32 %s277, 1
    %s279 = sor.u32 %s277, %s278
    %s280 = sand.u32 51, %s279
    %s281 = sshrl.u32 %s280, 2
    %s282 = sor.u32 %s280, %s281
    %s283 = sand.u32 15, %s282
    %v284 = vld [vmem:[%s274] sm:%s283]
    %v285 = vunpack.c.l.bf16 %v284
    %v286 = vunpack.c.h.bf16 %v284
    %v287 = vlaneseq
    %v288 = vand.u32 %v287, 127
    %vm290 = vcmp.lt.s32.totalorder %v288, 27
    %v291 = vsel %vm290, %v285, %v14
    %v292 = vlaneseq
    %v293 = vand.u32 %v292, 127
    %296 = xla_tuple %v293, %v12
    %297 = xla_tuple %296
    %vm298 = vcmp.lt.s32.totalorder %v293, %v12
    %v299 = vsel %vm298, 1, 0
    %300 = xla_tuple %v299
    %301 = xla_tuple %v299, %v291, %v19
    %302 = xla_tuple %301
    %v303 = vsel %vm298, %v291, %v19
    %304 = xla_tuple %v303
    %s305 = scalar_lea.vmem [#allocation7], 28
    %v306 = vpack.c.bf16 0.0, %v303
    %308 = vst [vmem:[%s305] sm:$0xf] %v306
    %s309 = scalar_lea.vmem %s4, 32
    %s311 = sor.u32 255, 127
    %s312 = sand.u32 %s311, 85
    %s313 = sshrl.u32 %s312, 1
    %s314 = sor.u32 %s312, %s313
    %s315 = sand.u32 51, %s314
    %s316 = sshrl.u32 %s315, 2
    %s317 = sor.u32 %s315, %s316
    %s318 = sand.u32 15, %s317
    %v319 = vld [vmem:[%s309] sm:%s318]
    %v320 = vunpack.c.l.bf16 %v319
    %v321 = vunpack.c.h.bf16 %v319
    %v322 = vlaneseq
    %v323 = vand.u32 %v322, 127
    %vm325 = vcmp.lt.s32.totalorder %v323, 27
    %v326 = vsel %vm325, %v320, %v14
    %v327 = vlaneseq
    %v328 = vand.u32 %v327, 127
    %331 = xla_tuple %v328, %v12
    %332 = xla_tuple %331
    %vm333 = vcmp.lt.s32.totalorder %v328, %v12
    %v334 = vsel %vm333, 1, 0
    %335 = xla_tuple %v334
    %336 = xla_tuple %v334, %v326, %v19
    %337 = xla_tuple %336
    %v338 = vsel %vm333, %v326, %v19
    %339 = xla_tuple %v338
    %s340 = scalar_lea.vmem [#allocation7], 32
    %v341 = vpack.c.bf16 0.0, %v338
    %343 = vst [vmem:[%s340] sm:$0xf] %v341
    %s344 = scalar_lea.vmem %s4, 36
    %s346 = sor.u32 255, 127
    %s347 = sand.u32 %s346, 85
    %s348 = sshrl.u32 %s347, 1
    %s349 = sor.u32 %s347, %s348
    %s350 = sand.u32 51, %s349
    %s351 = sshrl.u32 %s350, 2
    %s352 = sor.u32 %s350, %s351
    %s353 = sand.u32 15, %s352
    %v354 = vld [vmem:[%s344] sm:%s353]
    %v355 = vunpack.c.l.bf16 %v354
    %v356 = vunpack.c.h.bf16 %v354
    %v357 = vlaneseq
    %v358 = vand.u32 %v357, 127
    %vm360 = vcmp.lt.s32.totalorder %v358, 27
    %v361 = vsel %vm360, %v355, %v14
    %v362 = vlaneseq
    %v363 = vand.u32 %v362, 127
    %366 = xla_tuple %v363, %v12
    %367 = xla_tuple %366
    %vm368 = vcmp.lt.s32.totalorder %v363, %v12
    %v369 = vsel %vm368, 1, 0
    %370 = xla_tuple %v369
    %371 = xla_tuple %v369, %v361, %v19
    %372 = xla_tuple %371
    %v373 = vsel %vm368, %v361, %v19
    %374 = xla_tuple %v373
    %s375 = scalar_lea.vmem [#allocation7], 36
    %v376 = vpack.c.bf16 0.0, %v373
    %378 = vst [vmem:[%s375] sm:$0xf] %v376
    %s379 = scalar_lea.vmem %s4, 40
    %s381 = sor.u32 255, 127
    %s382 = sand.u32 %s381, 85
    %s383 = sshrl.u32 %s382, 1
    %s384 = sor.u32 %s382, %s383
    %s385 = sand.u32 51, %s384
    %s386 = sshrl.u32 %s385, 2
    %s387 = sor.u32 %s385, %s386
    %s388 = sand.u32 15, %s387
    %v389 = vld [vmem:[%s379] sm:%s388]
    %v390 = vunpack.c.l.bf16 %v389
    %v391 = vunpack.c.h.bf16 %v389
    %v392 = vlaneseq
    %v393 = vand.u32 %v392, 127
    %vm395 = vcmp.lt.s32.totalorder %v393, 27
    %v396 = vsel %vm395, %v390, %v14
    %v397 = vlaneseq
    %v398 = vand.u32 %v397, 127
    %401 = xla_tuple %v398, %v12
    %402 = xla_tuple %401
    %vm403 = vcmp.lt.s32.totalorder %v398, %v12
    %v404 = vsel %vm403, 1, 0
    %405 = xla_tuple %v404
    %406 = xla_tuple %v404, %v396, %v19
    %407 = xla_tuple %406
    %v408 = vsel %vm403, %v396, %v19
    %409 = xla_tuple %v408
    %s410 = scalar_lea.vmem [#allocation7], 40
    %v411 = vpack.c.bf16 0.0, %v408
    %413 = vst [vmem:[%s410] sm:$0xf] %v411
    %s414 = scalar_lea.vmem %s4, 44
    %s416 = sor.u32 255, 127
    %s417 = sand.u32 %s416, 85
    %s418 = sshrl.u32 %s417, 1
    %s419 = sor.u32 %s417, %s418
    %s420 = sand.u32 51, %s419
    %s421 = sshrl.u32 %s420, 2
    %s422 = sor.u32 %s420, %s421
    %s423 = sand.u32 15, %s422
    %v424 = vld [vmem:[%s414] sm:%s423]
    %v425 = vunpack.c.l.bf16 %v424
    %v426 = vunpack.c.h.bf16 %v424
    %v427 = vlaneseq
    %v428 = vand.u32 %v427, 127
    %vm430 = vcmp.lt.s32.totalorder %v428, 27
    %v431 = vsel %vm430, %v425, %v14
    %v432 = vlaneseq
    %v433 = vand.u32 %v432, 127
    %436 = xla_tuple %v433, %v12
    %437 = xla_tuple %436
    %vm438 = vcmp.lt.s32.totalorder %v433, %v12
    %v439 = vsel %vm438, 1, 0
    %440 = xla_tuple %v439
    %441 = xla_tuple %v439, %v431, %v19
    %442 = xla_tuple %441
    %v443 = vsel %vm438, %v431, %v19
    %444 = xla_tuple %v443
    %s445 = scalar_lea.vmem [#allocation7], 44
    %v446 = vpack.c.bf16 0.0, %v443
    %448 = vst [vmem:[%s445] sm:$0xf] %v446
    %s449 = scalar_lea.vmem %s4, 48
    %s451 = sor.u32 255, 127
    %s452 = sand.u32 %s451, 85
    %s453 = sshrl.u32 %s452, 1
    %s454 = sor.u32 %s452, %s453
    %s455 = sand.u32 51, %s454
    %s456 = sshrl.u32 %s455, 2
    %s457 = sor.u32 %s455, %s456
    %s458 = sand.u32 15, %s457
    %v459 = vld [vmem:[%s449] sm:%s458]
    %v460 = vunpack.c.l.bf16 %v459
    %v461 = vunpack.c.h.bf16 %v459
    %v462 = vlaneseq
    %v463 = vand.u32 %v462, 127
    %vm465 = vcmp.lt.s32.totalorder %v463, 27
    %v466 = vsel %vm465, %v460, %v14
    %v467 = vlaneseq
    %v468 = vand.u32 %v467, 127
    %471 = xla_tuple %v468, %v12
    %472 = xla_tuple %471
    %vm473 = vcmp.lt.s32.totalorder %v468, %v12
    %v474 = vsel %vm473, 1, 0
    %475 = xla_tuple %v474
    %476 = xla_tuple %v474, %v466, %v19
    %477 = xla_tuple %476
    %v478 = vsel %vm473, %v466, %v19
    %479 = xla_tuple %v478
    %s480 = scalar_lea.vmem [#allocation7], 48
    %v481 = vpack.c.bf16 0.0, %v478
    %483 = vst [vmem:[%s480] sm:$0xf] %v481
    %s484 = scalar_lea.vmem %s4, 52
    %s486 = sor.u32 255, 127
    %s487 = sand.u32 %s486, 85
    %s488 = sshrl.u32 %s487, 1
    %s489 = sor.u32 %s487, %s488
    %s490 = sand.u32 51, %s489
    %s491 = sshrl.u32 %s490, 2
    %s492 = sor.u32 %s490, %s491
    %s493 = sand.u32 15, %s492
    %v494 = vld [vmem:[%s484] sm:%s493]
    %v495 = vunpack.c.l.bf16 %v494
    %v496 = vunpack.c.h.bf16 %v494
    %v497 = vlaneseq
    %v498 = vand.u32 %v497, 127
    %vm500 = vcmp.lt.s32.totalorder %v498, 27
    %v501 = vsel %vm500, %v495, %v14
    %v502 = vlaneseq
    %v503 = vand.u32 %v502, 127
    %506 = xla_tuple %v503, %v12
    %507 = xla_tuple %506
    %vm508 = vcmp.lt.s32.totalorder %v503, %v12
    %v509 = vsel %vm508, 1, 0
    %510 = xla_tuple %v509
    %511 = xla_tuple %v509, %v501, %v19
    %512 = xla_tuple %511
    %v513 = vsel %vm508, %v501, %v19
    %514 = xla_tuple %v513
    %s515 = scalar_lea.vmem [#allocation7], 52
    %v516 = vpack.c.bf16 0.0, %v513
    %518 = vst [vmem:[%s515] sm:$0xf] %v516
    %s519 = scalar_lea.vmem %s4, 56
    %s521 = sor.u32 255, 127
    %s522 = sand.u32 %s521, 85
    %s523 = sshrl.u32 %s522, 1
    %s524 = sor.u32 %s522, %s523
    %s525 = sand.u32 51, %s524
    %s526 = sshrl.u32 %s525, 2
    %s527 = sor.u32 %s525, %s526
    %s528 = sand.u32 15, %s527
    %v529 = vld [vmem:[%s519] sm:%s528]
    %v530 = vunpack.c.l.bf16 %v529
    %v531 = vunpack.c.h.bf16 %v529
    %v532 = vlaneseq
    %v533 = vand.u32 %v532, 127
    %vm535 = vcmp.lt.s32.totalorder %v533, 27
    %v536 = vsel %vm535, %v530, %v14
    %v537 = vlaneseq
    %v538 = vand.u32 %v537, 127
    %541 = xla_tuple %v538, %v12
    %542 = xla_tuple %541
    %vm543 = vcmp.lt.s32.totalorder %v538, %v12
    %v544 = vsel %vm543, 1, 0
    %545 = xla_tuple %v544
    %546 = xla_tuple %v544, %v536, %v19
    %547 = xla_tuple %546
    %v548 = vsel %vm543, %v536, %v19
    %549 = xla_tuple %v548
    %s550 = scalar_lea.vmem [#allocation7], 56
    %v551 = vpack.c.bf16 0.0, %v548
    %553 = vst [vmem:[%s550] sm:$0xf] %v551
    %s554 = scalar_lea.vmem %s4, 60
    %s556 = sor.u32 255, 127
    %s557 = sand.u32 %s556, 85
    %s558 = sshrl.u32 %s557, 1
    %s559 = sor.u32 %s557, %s558
    %s560 = sand.u32 51, %s559
    %s561 = sshrl.u32 %s560, 2
    %s562 = sor.u32 %s560, %s561
    %s563 = sand.u32 15, %s562
    %v564 = vld [vmem:[%s554] sm:%s563]
    %v565 = vunpack.c.l.bf16 %v564
    %v566 = vunpack.c.h.bf16 %v564
    %v567 = vlaneseq
    %v568 = vand.u32 %v567, 127
    %vm570 = vcmp.lt.s32.totalorder %v568, 27
    %v571 = vsel %vm570, %v565, %v14
    %v572 = vlaneseq
    %v573 = vand.u32 %v572, 127
    %576 = xla_tuple %v573, %v12
    %577 = xla_tuple %576
    %vm578 = vcmp.lt.s32.totalorder %v573, %v12
    %v579 = vsel %vm578, 1, 0
    %580 = xla_tuple %v579
    %581 = xla_tuple %v579, %v571, %v19
    %582 = xla_tuple %581
    %v583 = vsel %vm578, %v571, %v19
    %584 = xla_tuple %v583
    %s585 = scalar_lea.vmem [#allocation7], 60
    %v586 = vpack.c.bf16 0.0, %v583
    %588 = vst [vmem:[%s585] sm:$0xf] %v586
    %s589 = scalar_lea.vmem %s4, 64
    %s591 = sor.u32 255, 127
    %s592 = sand.u32 %s591, 85
    %s593 = sshrl.u32 %s592, 1
    %s594 = sor.u32 %s592, %s593
    %s595 = sand.u32 51, %s594
    %s596 = sshrl.u32 %s595, 2
    %s597 = sor.u32 %s595, %s596
    %s598 = sand.u32 15, %s597
    %v599 = vld [vmem:[%s589] sm:%s598]
    %v600 = vunpack.c.l.bf16 %v599
    %v601 = vunpack.c.h.bf16 %v599
    %v602 = vlaneseq
    %v603 = vand.u32 %v602, 127
    %vm605 = vcmp.lt.s32.totalorder %v603, 27
    %v606 = vsel %vm605, %v600, %v14
    %v607 = vlaneseq
    %v608 = vand.u32 %v607, 127
    %611 = xla_tuple %v608, %v12
    %612 = xla_tuple %611
    %vm613 = vcmp.lt.s32.totalorder %v608, %v12
    %v614 = vsel %vm613, 1, 0
    %615 = xla_tuple %v614
    %616 = xla_tuple %v614, %v606, %v19
    %617 = xla_tuple %616
    %v618 = vsel %vm613, %v606, %v19
    %619 = xla_tuple %v618
    %s620 = scalar_lea.vmem [#allocation7], 64
    %v621 = vpack.c.bf16 0.0, %v618
    %623 = vst [vmem:[%s620] sm:$0xf] %v621
    %s624 = scalar_lea.vmem %s4, 68
    %s626 = sor.u32 255, 127
    %s627 = sand.u32 %s626, 85
    %s628 = sshrl.u32 %s627, 1
    %s629 = sor.u32 %s627, %s628
    %s630 = sand.u32 51, %s629
    %s631 = sshrl.u32 %s630, 2
    %s632 = sor.u32 %s630, %s631
    %s633 = sand.u32 15, %s632
    %v634 = vld [vmem:[%s624] sm:%s633]
    %v635 = vunpack.c.l.bf16 %v634
    %v636 = vunpack.c.h.bf16 %v634
    %v637 = vlaneseq
    %v638 = vand.u32 %v637, 127
    %vm640 = vcmp.lt.s32.totalorder %v638, 27
    %v641 = vsel %vm640, %v635, %v14
    %v642 = vlaneseq
    %v643 = vand.u32 %v642, 127
    %646 = xla_tuple %v643, %v12
    %647 = xla_tuple %646
    %vm648 = vcmp.lt.s32.totalorder %v643, %v12
    %v649 = vsel %vm648, 1, 0
    %650 = xla_tuple %v649
    %651 = xla_tuple %v649, %v641, %v19
    %652 = xla_tuple %651
    %v653 = vsel %vm648, %v641, %v19
    %654 = xla_tuple %v653
    %s655 = scalar_lea.vmem [#allocation7], 68
    %v656 = vpack.c.bf16 0.0, %v653
    %658 = vst [vmem:[%s655] sm:$0xf] %v656
    %s659 = scalar_lea.vmem %s4, 72
    %s661 = sor.u32 255, 127
    %s662 = sand.u32 %s661, 85
    %s663 = sshrl.u32 %s662, 1
    %s664 = sor.u32 %s662, %s663
    %s665 = sand.u32 51, %s664
    %s666 = sshrl.u32 %s665, 2
    %s667 = sor.u32 %s665, %s666
    %s668 = sand.u32 15, %s667
    %v669 = vld [vmem:[%s659] sm:%s668]
    %v670 = vunpack.c.l.bf16 %v669
    %v671 = vunpack.c.h.bf16 %v669
    %v672 = vlaneseq
    %v673 = vand.u32 %v672, 127
    %vm675 = vcmp.lt.s32.totalorder %v673, 27
    %v676 = vsel %vm675, %v670, %v14
    %v677 = vlaneseq
    %v678 = vand.u32 %v677, 127
    %681 = xla_tuple %v678, %v12
    %682 = xla_tuple %681
    %vm683 = vcmp.lt.s32.totalorder %v678, %v12
    %v684 = vsel %vm683, 1, 0
    %685 = xla_tuple %v684
    %686 = xla_tuple %v684, %v676, %v19
    %687 = xla_tuple %686
    %v688 = vsel %vm683, %v676, %v19
    %689 = xla_tuple %v688
    %s690 = scalar_lea.vmem [#allocation7], 72
    %v691 = vpack.c.bf16 0.0, %v688
    %693 = vst [vmem:[%s690] sm:$0xf] %v691
    %s694 = scalar_lea.vmem %s4, 76
    %s696 = sor.u32 255, 127
    %s697 = sand.u32 %s696, 85
    %s698 = sshrl.u32 %s697, 1
    %s699 = sor.u32 %s697, %s698
    %s700 = sand.u32 51, %s699
    %s701 = sshrl.u32 %s700, 2
    %s702 = sor.u32 %s700, %s701
    %s703 = sand.u32 15, %s702
    %v704 = vld [vmem:[%s694] sm:%s703]
    %v705 = vunpack.c.l.bf16 %v704
    %v706 = vunpack.c.h.bf16 %v704
    %v707 = vlaneseq
    %v708 = vand.u32 %v707, 127
    %vm710 = vcmp.lt.s32.totalorder %v708, 27
    %v711 = vsel %vm710, %v705, %v14
    %v712 = vlaneseq
    %v713 = vand.u32 %v712, 127
    %716 = xla_tuple %v713, %v12
    %717 = xla_tuple %716
    %vm718 = vcmp.lt.s32.totalorder %v713, %v12
    %v719 = vsel %vm718, 1, 0
    %720 = xla_tuple %v719
    %721 = xla_tuple %v719, %v711, %v19
    %722 = xla_tuple %721
    %v723 = vsel %vm718, %v711, %v19
    %724 = xla_tuple %v723
    %s725 = scalar_lea.vmem [#allocation7], 76
    %v726 = vpack.c.bf16 0.0, %v723
    %728 = vst [vmem:[%s725] sm:$0xf] %v726
    %s729 = scalar_lea.vmem %s4, 80
    %s731 = sor.u32 255, 127
    %s732 = sand.u32 %s731, 85
    %s733 = sshrl.u32 %s732, 1
    %s734 = sor.u32 %s732, %s733
    %s735 = sand.u32 51, %s734
    %s736 = sshrl.u32 %s735, 2
    %s737 = sor.u32 %s735, %s736
    %s738 = sand.u32 15, %s737
    %v739 = vld [vmem:[%s729] sm:%s738]
    %v740 = vunpack.c.l.bf16 %v739
    %v741 = vunpack.c.h.bf16 %v739
    %v742 = vlaneseq
    %v743 = vand.u32 %v742, 127
    %vm745 = vcmp.lt.s32.totalorder %v743, 27
    %v746 = vsel %vm745, %v740, %v14
    %v747 = vlaneseq
    %v748 = vand.u32 %v747, 127
    %751 = xla_tuple %v748, %v12
    %752 = xla_tuple %751
    %vm753 = vcmp.lt.s32.totalorder %v748, %v12
    %v754 = vsel %vm753, 1, 0
    %755 = xla_tuple %v754
    %756 = xla_tuple %v754, %v746, %v19
    %757 = xla_tuple %756
    %v758 = vsel %vm753, %v746, %v19
    %759 = xla_tuple %v758
    %s760 = scalar_lea.vmem [#allocation7], 80
    %v761 = vpack.c.bf16 0.0, %v758
    %763 = vst [vmem:[%s760] sm:$0xf] %v761
    %s764 = scalar_lea.vmem %s4, 84
    %s766 = sor.u32 255, 127
    %s767 = sand.u32 %s766, 85
    %s768 = sshrl.u32 %s767, 1
    %s769 = sor.u32 %s767, %s768
    %s770 = sand.u32 51, %s769
    %s771 = sshrl.u32 %s770, 2
    %s772 = sor.u32 %s770, %s771
    %s773 = sand.u32 15, %s772
    %v774 = vld [vmem:[%s764] sm:%s773]
    %v775 = vunpack.c.l.bf16 %v774
    %v776 = vunpack.c.h.bf16 %v774
    %v777 = vlaneseq
    %v778 = vand.u32 %v777, 127
    %vm780 = vcmp.lt.s32.totalorder %v778, 27
    %v781 = vsel %vm780, %v775, %v14
    %v782 = vlaneseq
    %v783 = vand.u32 %v782, 127
    %786 = xla_tuple %v783, %v12
    %787 = xla_tuple %786
    %vm788 = vcmp.lt.s32.totalorder %v783, %v12
    %v789 = vsel %vm788, 1, 0
    %790 = xla_tuple %v789
    %791 = xla_tuple %v789, %v781, %v19
    %792 = xla_tuple %791
    %v793 = vsel %vm788, %v781, %v19
    %794 = xla_tuple %v793
    %s795 = scalar_lea.vmem [#allocation7], 84
    %v796 = vpack.c.bf16 0.0, %v793
    %798 = vst [vmem:[%s795] sm:$0xf] %v796
    %s799 = scalar_lea.vmem %s4, 88
    %s801 = sor.u32 255, 127
    %s802 = sand.u32 %s801, 85
    %s803 = sshrl.u32 %s802, 1
    %s804 = sor.u32 %s802, %s803
    %s805 = sand.u32 51, %s804
    %s806 = sshrl.u32 %s805, 2
    %s807 = sor.u32 %s805, %s806
    %s808 = sand.u32 15, %s807
    %v809 = vld [vmem:[%s799] sm:%s808]
    %v810 = vunpack.c.l.bf16 %v809
    %v811 = vunpack.c.h.bf16 %v809
    %v812 = vlaneseq
    %v813 = vand.u32 %v812, 127
    %vm815 = vcmp.lt.s32.totalorder %v813, 27
    %v816 = vsel %vm815, %v810, %v14
    %v817 = vlaneseq
    %v818 = vand.u32 %v817, 127
    %821 = xla_tuple %v818, %v12
    %822 = xla_tuple %821
    %vm823 = vcmp.lt.s32.totalorder %v818, %v12
    %v824 = vsel %vm823, 1, 0
    %825 = xla_tuple %v824
    %826 = xla_tuple %v824, %v816, %v19
    %827 = xla_tuple %826
    %v828 = vsel %vm823, %v816, %v19
    %829 = xla_tuple %v828
    %s830 = scalar_lea.vmem [#allocation7], 88
    %v831 = vpack.c.bf16 0.0, %v828
    %833 = vst [vmem:[%s830] sm:$0xf] %v831
    %s834 = scalar_lea.vmem %s4, 92
    %s836 = sor.u32 255, 127
    %s837 = sand.u32 %s836, 85
    %s838 = sshrl.u32 %s837, 1
    %s839 = sor.u32 %s837, %s838
    %s840 = sand.u32 51, %s839
    %s841 = sshrl.u32 %s840, 2
    %s842 = sor.u32 %s840, %s841
    %s843 = sand.u32 15, %s842
    %v844 = vld [vmem:[%s834] sm:%s843]
    %v845 = vunpack.c.l.bf16 %v844
    %v846 = vunpack.c.h.bf16 %v844
    %v847 = vlaneseq
    %v848 = vand.u32 %v847, 127
    %vm850 = vcmp.lt.s32.totalorder %v848, 27
    %v851 = vsel %vm850, %v845, %v14
    %v852 = vlaneseq
    %v853 = vand.u32 %v852, 127
    %856 = xla_tuple %v853, %v12
    %857 = xla_tuple %856
    %vm858 = vcmp.lt.s32.totalorder %v853, %v12
    %v859 = vsel %vm858, 1, 0
    %860 = xla_tuple %v859
    %861 = xla_tuple %v859, %v851, %v19
    %862 = xla_tuple %861
    %v863 = vsel %vm858, %v851, %v19
    %864 = xla_tuple %v863
    %s865 = scalar_lea.vmem [#allocation7], 92
    %v866 = vpack.c.bf16 0.0, %v863
    %868 = vst [vmem:[%s865] sm:$0xf] %v866
    %s869 = scalar_lea.vmem %s4, 96
    %s871 = sor.u32 255, 127
    %s872 = sand.u32 %s871, 85
    %s873 = sshrl.u32 %s872, 1
    %s874 = sor.u32 %s872, %s873
    %s875 = sand.u32 51, %s874
    %s876 = sshrl.u32 %s875, 2
    %s877 = sor.u32 %s875, %s876
    %s878 = sand.u32 15, %s877
    %v879 = vld [vmem:[%s869] sm:%s878]
    %v880 = vunpack.c.l.bf16 %v879
    %v881 = vunpack.c.h.bf16 %v879
    %v882 = vlaneseq
    %v883 = vand.u32 %v882, 127
    %vm885 = vcmp.lt.s32.totalorder %v883, 27
    %v886 = vsel %vm885, %v880, %v14
    %v887 = vlaneseq
    %v888 = vand.u32 %v887, 127
    %891 = xla_tuple %v888, %v12
    %892 = xla_tuple %891
    %vm893 = vcmp.lt.s32.totalorder %v888, %v12
    %v894 = vsel %vm893, 1, 0
    %895 = xla_tuple %v894
    %896 = xla_tuple %v894, %v886, %v19
    %897 = xla_tuple %896
    %v898 = vsel %vm893, %v886, %v19
    %899 = xla_tuple %v898
    %s900 = scalar_lea.vmem [#allocation7], 96
    %v901 = vpack.c.bf16 0.0, %v898
    %903 = vst [vmem:[%s900] sm:$0xf] %v901
    %s904 = scalar_lea.vmem %s4, 100
    %s906 = sor.u32 255, 127
    %s907 = sand.u32 %s906, 85
    %s908 = sshrl.u32 %s907, 1
    %s909 = sor.u32 %s907, %s908
    %s910 = sand.u32 51, %s909
    %s911 = sshrl.u32 %s910, 2
    %s912 = sor.u32 %s910, %s911
    %s913 = sand.u32 15, %s912
    %v914 = vld [vmem:[%s904] sm:%s913]
    %v915 = vunpack.c.l.bf16 %v914
    %v916 = vunpack.c.h.bf16 %v914
    %v917 = vlaneseq
    %v918 = vand.u32 %v917, 127
    %vm920 = vcmp.lt.s32.totalorder %v918, 27
    %v921 = vsel %vm920, %v915, %v14
    %v922 = vlaneseq
    %v923 = vand.u32 %v922, 127
    %926 = xla_tuple %v923, %v12
    %927 = xla_tuple %926
    %vm928 = vcmp.lt.s32.totalorder %v923, %v12
    %v929 = vsel %vm928, 1, 0
    %930 = xla_tuple %v929
    %931 = xla_tuple %v929, %v921, %v19
    %932 = xla_tuple %931
    %v933 = vsel %vm928, %v921, %v19
    %934 = xla_tuple %v933
    %s935 = scalar_lea.vmem [#allocation7], 100
    %v936 = vpack.c.bf16 0.0, %v933
    %938 = vst [vmem:[%s935] sm:$0xf] %v936
    %s939 = scalar_lea.vmem %s4, 104
    %s941 = sor.u32 255, 127
    %s942 = sand.u32 %s941, 85
    %s943 = sshrl.u32 %s942, 1
    %s944 = sor.u32 %s942, %s943
    %s945 = sand.u32 51, %s944
    %s946 = sshrl.u32 %s945, 2
    %s947 = sor.u32 %s945, %s946
    %s948 = sand.u32 15, %s947
    %v949 = vld [vmem:[%s939] sm:%s948]
    %v950 = vunpack.c.l.bf16 %v949
    %v951 = vunpack.c.h.bf16 %v949
    %v952 = vlaneseq
    %v953 = vand.u32 %v952, 127
    %vm955 = vcmp.lt.s32.totalorder %v953, 27
    %v956 = vsel %vm955, %v950, %v14
    %v957 = vlaneseq
    %v958 = vand.u32 %v957, 127
    %961 = xla_tuple %v958, %v12
    %962 = xla_tuple %961
    %vm963 = vcmp.lt.s32.totalorder %v958, %v12
    %v964 = vsel %vm963, 1, 0
    %965 = xla_tuple %v964
    %966 = xla_tuple %v964, %v956, %v19
    %967 = xla_tuple %966
    %v968 = vsel %vm963, %v956, %v19
    %969 = xla_tuple %v968
    %s970 = scalar_lea.vmem [#allocation7], 104
    %v971 = vpack.c.bf16 0.0, %v968
    %973 = vst [vmem:[%s970] sm:$0xf] %v971
    %s974 = scalar_lea.vmem %s4, 108
    %s976 = sor.u32 255, 127
    %s977 = sand.u32 %s976, 85
    %s978 = sshrl.u32 %s977, 1
    %s979 = sor.u32 %s977, %s978
    %s980 = sand.u32 51, %s979
    %s981 = sshrl.u32 %s980, 2
    %s982 = sor.u32 %s980, %s981
    %s983 = sand.u32 15, %s982
    %v984 = vld [vmem:[%s974] sm:%s983]
    %v985 = vunpack.c.l.bf16 %v984
    %v986 = vunpack.c.h.bf16 %v984
    %v987 = vlaneseq
    %v988 = vand.u32 %v987, 127
    %vm990 = vcmp.lt.s32.totalorder %v988, 27
    %v991 = vsel %vm990, %v985, %v14
    %v992 = vlaneseq
    %v993 = vand.u32 %v992, 127
    %996 = xla_tuple %v993, %v12
    %997 = xla_tuple %996
    %vm998 = vcmp.lt.s32.totalorder %v993, %v12
    %v999 = vsel %vm998, 1, 0
    %1000 = xla_tuple %v999
    %1001 = xla_tuple %v999, %v991, %v19
    %1002 = xla_tuple %1001
    %v1003 = vsel %vm998, %v991, %v19
    %1004 = xla_tuple %v1003
    %s1005 = scalar_lea.vmem [#allocation7], 108
    %v1006 = vpack.c.bf16 0.0, %v1003
    %1008 = vst [vmem:[%s1005] sm:$0xf] %v1006
    %s1009 = scalar_lea.vmem %s4, 112
    %s1011 = sor.u32 255, 127
    %s1012 = sand.u32 %s1011, 85
    %s1013 = sshrl.u32 %s1012, 1
    %s1014 = sor.u32 %s1012, %s1013
    %s1015 = sand.u32 51, %s1014
    %s1016 = sshrl.u32 %s1015, 2
    %s1017 = sor.u32 %s1015, %s1016
    %s1018 = sand.u32 15, %s1017
    %v1019 = vld [vmem:[%s1009] sm:%s1018]
    %v1020 = vunpack.c.l.bf16 %v1019
    %v1021 = vunpack.c.h.bf16 %v1019
    %v1022 = vlaneseq
    %v1023 = vand.u32 %v1022, 127
    %vm1025 = vcmp.lt.s32.totalorder %v1023, 27
    %v1026 = vsel %vm1025, %v1020, %v14
    %v1027 = vlaneseq
    %v1028 = vand.u32 %v1027, 127
    %1031 = xla_tuple %v1028, %v12
    %1032 = xla_tuple %1031
    %vm1033 = vcmp.lt.s32.totalorder %v1028, %v12
    %v1034 = vsel %vm1033, 1, 0
    %1035 = xla_tuple %v1034
    %1036 = xla_tuple %v1034, %v1026, %v19
    %1037 = xla_tuple %1036
    %v1038 = vsel %vm1033, %v1026, %v19
    %1039 = xla_tuple %v1038
    %s1040 = scalar_lea.vmem [#allocation7], 112
    %v1041 = vpack.c.bf16 0.0, %v1038
    %1043 = vst [vmem:[%s1040] sm:$0xf] %v1041
    %s1044 = scalar_lea.vmem %s4, 116
    %s1046 = sor.u32 255, 127
    %s1047 = sand.u32 %s1046, 85
    %s1048 = sshrl.u32 %s1047, 1
    %s1049 = sor.u32 %s1047, %s1048
    %s1050 = sand.u32 51, %s1049
    %s1051 = sshrl.u32 %s1050, 2
    %s1052 = sor.u32 %s1050, %s1051
    %s1053 = sand.u32 15, %s1052
    %v1054 = vld [vmem:[%s1044] sm:%s1053]
    %v1055 = vunpack.c.l.bf16 %v1054
    %v1056 = vunpack.c.h.bf16 %v1054
    %v1057 = vlaneseq
    %v1058 = vand.u32 %v1057, 127
    %vm1060 = vcmp.lt.s32.totalorder %v1058, 27
    %v1061 = vsel %vm1060, %v1055, %v14
    %v1062 = vlaneseq
    %v1063 = vand.u32 %v1062, 127
    %1066 = xla_tuple %v1063, %v12
    %1067 = xla_tuple %1066
    %vm1068 = vcmp.lt.s32.totalorder %v1063, %v12
    %v1069 = vsel %vm1068, 1, 0
    %1070 = xla_tuple %v1069
    %1071 = xla_tuple %v1069, %v1061, %v19
    %1072 = xla_tuple %1071
    %v1073 = vsel %vm1068, %v1061, %v19
    %1074 = xla_tuple %v1073
    %s1075 = scalar_lea.vmem [#allocation7], 116
    %v1076 = vpack.c.bf16 0.0, %v1073
    %1078 = vst [vmem:[%s1075] sm:$0xf] %v1076
    %s1079 = scalar_lea.vmem %s4, 120
    %s1081 = sor.u32 255, 127
    %s1082 = sand.u32 %s1081, 85
    %s1083 = sshrl.u32 %s1082, 1
    %s1084 = sor.u32 %s1082, %s1083
    %s1085 = sand.u32 51, %s1084
    %s1086 = sshrl.u32 %s1085, 2
    %s1087 = sor.u32 %s1085, %s1086
    %s1088 = sand.u32 15, %s1087
    %v1089 = vld [vmem:[%s1079] sm:%s1088]
    %v1090 = vunpack.c.l.bf16 %v1089
    %v1091 = vunpack.c.h.bf16 %v1089
    %v1092 = vlaneseq
    %v1093 = vand.u32 %v1092, 127
    %vm1095 = vcmp.lt.s32.totalorder %v1093, 27
    %v1096 = vsel %vm1095, %v1090, %v14
    %v1097 = vlaneseq
    %v1098 = vand.u32 %v1097, 127
    %1101 = xla_tuple %v1098, %v12
    %1102 = xla_tuple %1101
    %vm1103 = vcmp.lt.s32.totalorder %v1098, %v12
    %v1104 = vsel %vm1103, 1, 0
    %1105 = xla_tuple %v1104
    %1106 = xla_tuple %v1104, %v1096, %v19
    %1107 = xla_tuple %1106
    %v1108 = vsel %vm1103, %v1096, %v19
    %1109 = xla_tuple %v1108
    %s1110 = scalar_lea.vmem [#allocation7], 120
    %v1111 = vpack.c.bf16 0.0, %v1108
    %1113 = vst [vmem:[%s1110] sm:$0xf] %v1111
    %s1114 = scalar_lea.vmem %s4, 124
    %s1116 = sor.u32 255, 127
    %s1117 = sand.u32 %s1116, 85
    %s1118 = sshrl.u32 %s1117, 1
    %s1119 = sor.u32 %s1117, %s1118
    %s1120 = sand.u32 51, %s1119
    %s1121 = sshrl.u32 %s1120, 2
    %s1122 = sor.u32 %s1120, %s1121
    %s1123 = sand.u32 15, %s1122
    %v1124 = vld [vmem:[%s1114] sm:%s1123]
    %v1125 = vunpack.c.l.bf16 %v1124
    %v1126 = vunpack.c.h.bf16 %v1124
    %v1127 = vlaneseq
    %v1128 = vand.u32 %v1127, 127
    %vm1130 = vcmp.lt.s32.totalorder %v1128, 27
    %v1131 = vsel %vm1130, %v1125, %v14
    %v1132 = vlaneseq
    %v1133 = vand.u32 %v1132, 127
    %1136 = xla_tuple %v1133, %v12
    %1137 = xla_tuple %1136
    %vm1138 = vcmp.lt.s32.totalorder %v1133, %v12
    %v1139 = vsel %vm1138, 1, 0
    %1140 = xla_tuple %v1139
    %1141 = xla_tuple %v1139, %v1131, %v19
    %1142 = xla_tuple %1141
    %v1143 = vsel %vm1138, %v1131, %v19
    %1144 = xla_tuple %v1143
    %s1145 = scalar_lea.vmem [#allocation7], 124
    %v1146 = vpack.c.bf16 0.0, %v1143
    %1148 = vst [vmem:[%s1145] sm:$0xf] %v1146
    %s1149 = scalar_lea.vmem %s4, 128
    %s1151 = sor.u32 255, 127
    %s1152 = sand.u32 %s1151, 85
    %s1153 = sshrl.u32 %s1152, 1
    %s1154 = sor.u32 %s1152, %s1153
    %s1155 = sand.u32 51, %s1154
    %s1156 = sshrl.u32 %s1155, 2
    %s1157 = sor.u32 %s1155, %s1156
    %s1158 = sand.u32 15, %s1157
    %v1159 = vld [vmem:[%s1149] sm:%s1158]
    %v1160 = vunpack.c.l.bf16 %v1159
    %v1161 = vunpack.c.h.bf16 %v1159
    %v1162 = vlaneseq
    %v1163 = vand.u32 %v1162, 127
    %vm1165 = vcmp.lt.s32.totalorder %v1163, 27
    %v1166 = vsel %vm1165, %v1160, %v14
    %v1167 = vlaneseq
    %v1168 = vand.u32 %v1167, 127
    %1171 = xla_tuple %v1168, %v12
    %1172 = xla_tuple %1171
    %vm1173 = vcmp.lt.s32.totalorder %v1168, %v12
    %v1174 = vsel %vm1173, 1, 0
    %1175 = xla_tuple %v1174
    %1176 = xla_tuple %v1174, %v1166, %v19
    %1177 = xla_tuple %1176
    %v1178 = vsel %vm1173, %v1166, %v19
    %1179 = xla_tuple %v1178
    %s1180 = scalar_lea.vmem [#allocation7], 128
    %v1181 = vpack.c.bf16 0.0, %v1178
    %1183 = vst [vmem:[%s1180] sm:$0xf] %v1181
    %s1184 = scalar_lea.vmem %s4, 132
    %s1186 = sor.u32 255, 127
    %s1187 = sand.u32 %s1186, 85
    %s1188 = sshrl.u32 %s1187, 1
    %s1189 = sor.u32 %s1187, %s1188
    %s1190 = sand.u32 51, %s1189
    %s1191 = sshrl.u32 %s1190, 2
    %s1192 = sor.u32 %s1190, %s1191
    %s1193 = sand.u32 15, %s1192
    %v1194 = vld [vmem:[%s1184] sm:%s1193]
    %v1195 = vunpack.c.l.bf16 %v1194
    %v1196 = vunpack.c.h.bf16 %v1194
    %v1197 = vlaneseq
    %v1198 = vand.u32 %v1197, 127
    %vm1200 = vcmp.lt.s32.totalorder %v1198, 27
    %v1201 = vsel %vm1200, %v1195, %v14
    %v1202 = vlaneseq
    %v1203 = vand.u32 %v1202, 127
    %1206 = xla_tuple %v1203, %v12
    %1207 = xla_tuple %1206
    %vm1208 = vcmp.lt.s32.totalorder %v1203, %v12
    %v1209 = vsel %vm1208, 1, 0
    %1210 = xla_tuple %v1209
    %1211 = xla_tuple %v1209, %v1201, %v19
    %1212 = xla_tuple %1211
    %v1213 = vsel %vm1208, %v1201, %v19
    %1214 = xla_tuple %v1213
    %s1215 = scalar_lea.vmem [#allocation7], 132
    %v1216 = vpack.c.bf16 0.0, %v1213
    %1218 = vst [vmem:[%s1215] sm:$0xf] %v1216
    %s1219 = scalar_lea.vmem %s4, 136
    %s1221 = sor.u32 255, 127
    %s1222 = sand.u32 %s1221, 85
    %s1223 = sshrl.u32 %s1222, 1
    %s1224 = sor.u32 %s1222, %s1223
    %s1225 = sand.u32 51, %s1224
    %s1226 = sshrl.u32 %s1225, 2
    %s1227 = sor.u32 %s1225, %s1226
    %s1228 = sand.u32 15, %s1227
    %v1229 = vld [vmem:[%s1219] sm:%s1228]
    %v1230 = vunpack.c.l.bf16 %v1229
    %v1231 = vunpack.c.h.bf16 %v1229
    %v1232 = vlaneseq
    %v1233 = vand.u32 %v1232, 127
    %vm1235 = vcmp.lt.s32.totalorder %v1233, 27
    %v1236 = vsel %vm1235, %v1230, %v14
    %v1237 = vlaneseq
    %v1238 = vand.u32 %v1237, 127
    %1241 = xla_tuple %v1238, %v12
    %1242 = xla_tuple %1241
    %vm1243 = vcmp.lt.s32.totalorder %v1238, %v12
    %v1244 = vsel %vm1243, 1, 0
    %1245 = xla_tuple %v1244
    %1246 = xla_tuple %v1244, %v1236, %v19
    %1247 = xla_tuple %1246
    %v1248 = vsel %vm1243, %v1236, %v19
    %1249 = xla_tuple %v1248
    %s1250 = scalar_lea.vmem [#allocation7], 136
    %v1251 = vpack.c.bf16 0.0, %v1248
    %1253 = vst [vmem:[%s1250] sm:$0xf] %v1251
    %s1254 = scalar_lea.vmem %s4, 140
    %s1256 = sor.u32 255, 127
    %s1257 = sand.u32 %s1256, 85
    %s1258 = sshrl.u32 %s1257, 1
    %s1259 = sor.u32 %s1257, %s1258
    %s1260 = sand.u32 51, %s1259
    %s1261 = sshrl.u32 %s1260, 2
    %s1262 = sor.u32 %s1260, %s1261
    %s1263 = sand.u32 15, %s1262
    %v1264 = vld [vmem:[%s1254] sm:%s1263]
    %v1265 = vunpack.c.l.bf16 %v1264
    %v1266 = vunpack.c.h.bf16 %v1264
    %v1267 = vlaneseq
    %v1268 = vand.u32 %v1267, 127
    %vm1270 = vcmp.lt.s32.totalorder %v1268, 27
    %v1271 = vsel %vm1270, %v1265, %v14
    %v1272 = vlaneseq
    %v1273 = vand.u32 %v1272, 127
    %1276 = xla_tuple %v1273, %v12
    %1277 = xla_tuple %1276
    %vm1278 = vcmp.lt.s32.totalorder %v1273, %v12
    %v1279 = vsel %vm1278, 1, 0
    %1280 = xla_tuple %v1279
    %1281 = xla_tuple %v1279, %v1271, %v19
    %1282 = xla_tuple %1281
    %v1283 = vsel %vm1278, %v1271, %v19
    %1284 = xla_tuple %v1283
    %s1285 = scalar_lea.vmem [#allocation7], 140
    %v1286 = vpack.c.bf16 0.0, %v1283
    %1288 = vst [vmem:[%s1285] sm:$0xf] %v1286
    %s1289 = scalar_lea.vmem %s4, 144
    %s1291 = sor.u32 255, 127
    %s1292 = sand.u32 %s1291, 85
    %s1293 = sshrl.u32 %s1292, 1
    %s1294 = sor.u32 %s1292, %s1293
    %s1295 = sand.u32 51, %s1294
    %s1296 = sshrl.u32 %s1295, 2
    %s1297 = sor.u32 %s1295, %s1296
    %s1298 = sand.u32 15, %s1297
    %v1299 = vld [vmem:[%s1289] sm:%s1298]
    %v1300 = vunpack.c.l.bf16 %v1299
    %v1301 = vunpack.c.h.bf16 %v1299
    %v1302 = vlaneseq
    %v1303 = vand.u32 %v1302, 127
    %vm1305 = vcmp.lt.s32.totalorder %v1303, 27
    %v1306 = vsel %vm1305, %v1300, %v14
    %v1307 = vlaneseq
    %v1308 = vand.u32 %v1307, 127
    %1311 = xla_tuple %v1308, %v12
    %1312 = xla_tuple %1311
    %vm1313 = vcmp.lt.s32.totalorder %v1308, %v12
    %v1314 = vsel %vm1313, 1, 0
    %1315 = xla_tuple %v1314
    %1316 = xla_tuple %v1314, %v1306, %v19
    %1317 = xla_tuple %1316
    %v1318 = vsel %vm1313, %v1306, %v19
    %1319 = xla_tuple %v1318
    %s1320 = scalar_lea.vmem [#allocation7], 144
    %v1321 = vpack.c.bf16 0.0, %v1318
    %1323 = vst [vmem:[%s1320] sm:$0xf] %v1321
    %s1324 = scalar_lea.vmem %s4, 148
    %s1326 = sor.u32 255, 127
    %s1327 = sand.u32 %s1326, 85
    %s1328 = sshrl.u32 %s1327, 1
    %s1329 = sor.u32 %s1327, %s1328
    %s1330 = sand.u32 51, %s1329
    %s1331 = sshrl.u32 %s1330, 2
    %s1332 = sor.u32 %s1330, %s1331
    %s1333 = sand.u32 15, %s1332
    %v1334 = vld [vmem:[%s1324] sm:%s1333]
    %v1335 = vunpack.c.l.bf16 %v1334
    %v1336 = vunpack.c.h.bf16 %v1334
    %v1337 = vlaneseq
    %v1338 = vand.u32 %v1337, 127
    %vm1340 = vcmp.lt.s32.totalorder %v1338, 27
    %v1341 = vsel %vm1340, %v1335, %v14
    %v1342 = vlaneseq
    %v1343 = vand.u32 %v1342, 127
    %1346 = xla_tuple %v1343, %v12
    %1347 = xla_tuple %1346
    %vm1348 = vcmp.lt.s32.totalorder %v1343, %v12
    %v1349 = vsel %vm1348, 1, 0
    %1350 = xla_tuple %v1349
    %1351 = xla_tuple %v1349, %v1341, %v19
    %1352 = xla_tuple %1351
    %v1353 = vsel %vm1348, %v1341, %v19
    %1354 = xla_tuple %v1353
    %s1355 = scalar_lea.vmem [#allocation7], 148
    %v1356 = vpack.c.bf16 0.0, %v1353
    %1358 = vst [vmem:[%s1355] sm:$0xf] %v1356
    %s1359 = scalar_lea.vmem %s4, 152
    %s1361 = sor.u32 255, 127
    %s1362 = sand.u32 %s1361, 85
    %s1363 = sshrl.u32 %s1362, 1
    %s1364 = sor.u32 %s1362, %s1363
    %s1365 = sand.u32 51, %s1364
    %s1366 = sshrl.u32 %s1365, 2
    %s1367 = sor.u32 %s1365, %s1366
    %s1368 = sand.u32 15, %s1367
    %v1369 = vld [vmem:[%s1359] sm:%s1368]
    %v1370 = vunpack.c.l.bf16 %v1369
    %v1371 = vunpack.c.h.bf16 %v1369
    %v1372 = vlaneseq
    %v1373 = vand.u32 %v1372, 127
    %vm1375 = vcmp.lt.s32.totalorder %v1373, 27
    %v1376 = vsel %vm1375, %v1370, %v14
    %v1377 = vlaneseq
    %v1378 = vand.u32 %v1377, 127
    %1381 = xla_tuple %v1378, %v12
    %1382 = xla_tuple %1381
    %vm1383 = vcmp.lt.s32.totalorder %v1378, %v12
    %v1384 = vsel %vm1383, 1, 0
    %1385 = xla_tuple %v1384
    %1386 = xla_tuple %v1384, %v1376, %v19
    %1387 = xla_tuple %1386
    %v1388 = vsel %vm1383, %v1376, %v19
    %1389 = xla_tuple %v1388
    %s1390 = scalar_lea.vmem [#allocation7], 152
    %v1391 = vpack.c.bf16 0.0, %v1388
    %1393 = vst [vmem:[%s1390] sm:$0xf] %v1391
    %s1394 = scalar_lea.vmem %s4, 156
    %s1396 = sor.u32 255, 127
    %s1397 = sand.u32 %s1396, 85
    %s1398 = sshrl.u32 %s1397, 1
    %s1399 = sor.u32 %s1397, %s1398
    %s1400 = sand.u32 51, %s1399
    %s1401 = sshrl.u32 %s1400, 2
    %s1402 = sor.u32 %s1400, %s1401
    %s1403 = sand.u32 15, %s1402
    %v1404 = vld [vmem:[%s1394] sm:%s1403]
    %v1405 = vunpack.c.l.bf16 %v1404
    %v1406 = vunpack.c.h.bf16 %v1404
    %v1407 = vlaneseq
    %v1408 = vand.u32 %v1407, 127
    %vm1410 = vcmp.lt.s32.totalorder %v1408, 27
    %v1411 = vsel %vm1410, %v1405, %v14
    %v1412 = vlaneseq
    %v1413 = vand.u32 %v1412, 127
    %1416 = xla_tuple %v1413, %v12
    %1417 = xla_tuple %1416
    %vm1418 = vcmp.lt.s32.totalorder %v1413, %v12
    %v1419 = vsel %vm1418, 1, 0
    %1420 = xla_tuple %v1419
    %1421 = xla_tuple %v1419, %v1411, %v19
    %1422 = xla_tuple %1421
    %v1423 = vsel %vm1418, %v1411, %v19
    %1424 = xla_tuple %v1423
    %s1425 = scalar_lea.vmem [#allocation7], 156
    %v1426 = vpack.c.bf16 0.0, %v1423
    %1428 = vst [vmem:[%s1425] sm:$0xf] %v1426
    %s1429 = scalar_lea.vmem %s4, 160
    %s1431 = sor.u32 255, 127
    %s1432 = sand.u32 %s1431, 85
    %s1433 = sshrl.u32 %s1432, 1
    %s1434 = sor.u32 %s1432, %s1433
    %s1435 = sand.u32 51, %s1434
    %s1436 = sshrl.u32 %s1435, 2
    %s1437 = sor.u32 %s1435, %s1436
    %s1438 = sand.u32 15, %s1437
    %v1439 = vld [vmem:[%s1429] sm:%s1438]
    %v1440 = vunpack.c.l.bf16 %v1439
    %v1441 = vunpack.c.h.bf16 %v1439
    %v1442 = vlaneseq
    %v1443 = vand.u32 %v1442, 127
    %vm1445 = vcmp.lt.s32.totalorder %v1443, 27
    %v1446 = vsel %vm1445, %v1440, %v14
    %v1447 = vlaneseq
    %v1448 = vand.u32 %v1447, 127
    %1451 = xla_tuple %v1448, %v12
    %1452 = xla_tuple %1451
    %vm1453 = vcmp.lt.s32.totalorder %v1448, %v12
    %v1454 = vsel %vm1453, 1, 0
    %1455 = xla_tuple %v1454
    %1456 = xla_tuple %v1454, %v1446, %v19
    %1457 = xla_tuple %1456
    %v1458 = vsel %vm1453, %v1446, %v19
    %1459 = xla_tuple %v1458
    %s1460 = scalar_lea.vmem [#allocation7], 160
    %v1461 = vpack.c.bf16 0.0, %v1458
    %1463 = vst [vmem:[%s1460] sm:$0xf] %v1461
    %s1464 = scalar_lea.vmem %s4, 164
    %s1466 = sor.u32 255, 127
    %s1467 = sand.u32 %s1466, 85
    %s1468 = sshrl.u32 %s1467, 1
    %s1469 = sor.u32 %s1467, %s1468
    %s1470 = sand.u32 51, %s1469
    %s1471 = sshrl.u32 %s1470, 2
    %s1472 = sor.u32 %s1470, %s1471
    %s1473 = sand.u32 15, %s1472
    %v1474 = vld [vmem:[%s1464] sm:%s1473]
    %v1475 = vunpack.c.l.bf16 %v1474
    %v1476 = vunpack.c.h.bf16 %v1474
    %v1477 = vlaneseq
    %v1478 = vand.u32 %v1477, 127
    %vm1480 = vcmp.lt.s32.totalorder %v1478, 27
    %v1481 = vsel %vm1480, %v1475, %v14
    %v1482 = vlaneseq
    %v1483 = vand.u32 %v1482, 127
    %1486 = xla_tuple %v1483, %v12
    %1487 = xla_tuple %1486
    %vm1488 = vcmp.lt.s32.totalorder %v1483, %v12
    %v1489 = vsel %vm1488, 1, 0
    %1490 = xla_tuple %v1489
    %1491 = xla_tuple %v1489, %v1481, %v19
    %1492 = xla_tuple %1491
    %v1493 = vsel %vm1488, %v1481, %v19
    %1494 = xla_tuple %v1493
    %s1495 = scalar_lea.vmem [#allocation7], 164
    %v1496 = vpack.c.bf16 0.0, %v1493
    %1498 = vst [vmem:[%s1495] sm:$0xf] %v1496
    %s1499 = scalar_lea.vmem %s4, 168
    %s1501 = sor.u32 255, 127
    %s1502 = sand.u32 %s1501, 85
    %s1503 = sshrl.u32 %s1502, 1
    %s1504 = sor.u32 %s1502, %s1503
    %s1505 = sand.u32 51, %s1504
    %s1506 = sshrl.u32 %s1505, 2
    %s1507 = sor.u32 %s1505, %s1506
    %s1508 = sand.u32 15, %s1507
    %v1509 = vld [vmem:[%s1499] sm:%s1508]
    %v1510 = vunpack.c.l.bf16 %v1509
    %v1511 = vunpack.c.h.bf16 %v1509
    %v1512 = vlaneseq
    %v1513 = vand.u32 %v1512, 127
    %vm1515 = vcmp.lt.s32.totalorder %v1513, 27
    %v1516 = vsel %vm1515, %v1510, %v14
    %v1517 = vlaneseq
    %v1518 = vand.u32 %v1517, 127
    %1521 = xla_tuple %v1518, %v12
    %1522 = xla_tuple %1521
    %vm1523 = vcmp.lt.s32.totalorder %v1518, %v12
    %v1524 = vsel %vm1523, 1, 0
    %1525 = xla_tuple %v1524
    %1526 = xla_tuple %v1524, %v1516, %v19
    %1527 = xla_tuple %1526
    %v1528 = vsel %vm1523, %v1516, %v19
    %1529 = xla_tuple %v1528
    %s1530 = scalar_lea.vmem [#allocation7], 168
    %v1531 = vpack.c.bf16 0.0, %v1528
    %1533 = vst [vmem:[%s1530] sm:$0xf] %v1531
    %s1534 = scalar_lea.vmem %s4, 172
    %s1536 = sor.u32 255, 127
    %s1537 = sand.u32 %s1536, 85
    %s1538 = sshrl.u32 %s1537, 1
    %s1539 = sor.u32 %s1537, %s1538
    %s1540 = sand.u32 51, %s1539
    %s1541 = sshrl.u32 %s1540, 2
    %s1542 = sor.u32 %s1540, %s1541
    %s1543 = sand.u32 15, %s1542
    %v1544 = vld [vmem:[%s1534] sm:%s1543]
    %v1545 = vunpack.c.l.bf16 %v1544
    %v1546 = vunpack.c.h.bf16 %v1544
    %v1547 = vlaneseq
    %v1548 = vand.u32 %v1547, 127
    %vm1550 = vcmp.lt.s32.totalorder %v1548, 27
    %v1551 = vsel %vm1550, %v1545, %v14
    %v1552 = vlaneseq
    %v1553 = vand.u32 %v1552, 127
    %1556 = xla_tuple %v1553, %v12
    %1557 = xla_tuple %1556
    %vm1558 = vcmp.lt.s32.totalorder %v1553, %v12
    %v1559 = vsel %vm1558, 1, 0
    %1560 = xla_tuple %v1559
    %1561 = xla_tuple %v1559, %v1551, %v19
    %1562 = xla_tuple %1561
    %v1563 = vsel %vm1558, %v1551, %v19
    %1564 = xla_tuple %v1563
    %s1565 = scalar_lea.vmem [#allocation7], 172
    %v1566 = vpack.c.bf16 0.0, %v1563
    %1568 = vst [vmem:[%s1565] sm:$0xf] %v1566
    %s1569 = scalar_lea.vmem %s4, 176
    %s1571 = sor.u32 255, 127
    %s1572 = sand.u32 %s1571, 85
    %s1573 = sshrl.u32 %s1572, 1
    %s1574 = sor.u32 %s1572, %s1573
    %s1575 = sand.u32 51, %s1574
    %s1576 = sshrl.u32 %s1575, 2
    %s1577 = sor.u32 %s1575, %s1576
    %s1578 = sand.u32 15, %s1577
    %v1579 = vld [vmem:[%s1569] sm:%s1578]
    %v1580 = vunpack.c.l.bf16 %v1579
    %v1581 = vunpack.c.h.bf16 %v1579
    %v1582 = vlaneseq
    %v1583 = vand.u32 %v1582, 127
    %vm1585 = vcmp.lt.s32.totalorder %v1583, 27
    %v1586 = vsel %vm1585, %v1580, %v14
    %v1587 = vlaneseq
    %v1588 = vand.u32 %v1587, 127
    %1591 = xla_tuple %v1588, %v12
    %1592 = xla_tuple %1591
    %vm1593 = vcmp.lt.s32.totalorder %v1588, %v12
    %v1594 = vsel %vm1593, 1, 0
    %1595 = xla_tuple %v1594
    %1596 = xla_tuple %v1594, %v1586, %v19
    %1597 = xla_tuple %1596
    %v1598 = vsel %vm1593, %v1586, %v19
    %1599 = xla_tuple %v1598
    %s1600 = scalar_lea.vmem [#allocation7], 176
    %v1601 = vpack.c.bf16 0.0, %v1598
    %1603 = vst [vmem:[%s1600] sm:$0xf] %v1601
    %s1604 = scalar_lea.vmem %s4, 180
    %s1606 = sor.u32 255, 127
    %s1607 = sand.u32 %s1606, 85
    %s1608 = sshrl.u32 %s1607, 1
    %s1609 = sor.u32 %s1607, %s1608
    %s1610 = sand.u32 51, %s1609
    %s1611 = sshrl.u32 %s1610, 2
    %s1612 = sor.u32 %s1610, %s1611
    %s1613 = sand.u32 15, %s1612
    %v1614 = vld [vmem:[%s1604] sm:%s1613]
    %v1615 = vunpack.c.l.bf16 %v1614
    %v1616 = vunpack.c.h.bf16 %v1614
    %v1617 = vlaneseq
    %v1618 = vand.u32 %v1617, 127
    %vm1620 = vcmp.lt.s32.totalorder %v1618, 27
    %v1621 = vsel %vm1620, %v1615, %v14
    %v1622 = vlaneseq
    %v1623 = vand.u32 %v1622, 127
    %1626 = xla_tuple %v1623, %v12
    %1627 = xla_tuple %1626
    %vm1628 = vcmp.lt.s32.totalorder %v1623, %v12
    %v1629 = vsel %vm1628, 1, 0
    %1630 = xla_tuple %v1629
    %1631 = xla_tuple %v1629, %v1621, %v19
    %1632 = xla_tuple %1631
    %v1633 = vsel %vm1628, %v1621, %v19
    %1634 = xla_tuple %v1633
    %s1635 = scalar_lea.vmem [#allocation7], 180
    %v1636 = vpack.c.bf16 0.0, %v1633
    %1638 = vst [vmem:[%s1635] sm:$0xf] %v1636
    %s1639 = scalar_lea.vmem %s4, 184
    %s1641 = sor.u32 255, 127
    %s1642 = sand.u32 %s1641, 85
    %s1643 = sshrl.u32 %s1642, 1
    %s1644 = sor.u32 %s1642, %s1643
    %s1645 = sand.u32 51, %s1644
    %s1646 = sshrl.u32 %s1645, 2
    %s1647 = sor.u32 %s1645, %s1646
    %s1648 = sand.u32 15, %s1647
    %v1649 = vld [vmem:[%s1639] sm:%s1648]
    %v1650 = vunpack.c.l.bf16 %v1649
    %v1651 = vunpack.c.h.bf16 %v1649
    %v1652 = vlaneseq
    %v1653 = vand.u32 %v1652, 127
    %vm1655 = vcmp.lt.s32.totalorder %v1653, 27
    %v1656 = vsel %vm1655, %v1650, %v14
    %v1657 = vlaneseq
    %v1658 = vand.u32 %v1657, 127
    %1661 = xla_tuple %v1658, %v12
    %1662 = xla_tuple %1661
    %vm1663 = vcmp.lt.s32.totalorder %v1658, %v12
    %v1664 = vsel %vm1663, 1, 0
    %1665 = xla_tuple %v1664
    %1666 = xla_tuple %v1664, %v1656, %v19
    %1667 = xla_tuple %1666
    %v1668 = vsel %vm1663, %v1656, %v19
    %1669 = xla_tuple %v1668
    %s1670 = scalar_lea.vmem [#allocation7], 184
    %v1671 = vpack.c.bf16 0.0, %v1668
    %1673 = vst [vmem:[%s1670] sm:$0xf] %v1671
    %s1674 = scalar_lea.vmem %s4, 188
    %s1676 = sor.u32 255, 127
    %s1677 = sand.u32 %s1676, 85
    %s1678 = sshrl.u32 %s1677, 1
    %s1679 = sor.u32 %s1677, %s1678
    %s1680 = sand.u32 51, %s1679
    %s1681 = sshrl.u32 %s1680, 2
    %s1682 = sor.u32 %s1680, %s1681
    %s1683 = sand.u32 15, %s1682
    %v1684 = vld [vmem:[%s1674] sm:%s1683]
    %v1685 = vunpack.c.l.bf16 %v1684
    %v1686 = vunpack.c.h.bf16 %v1684
    %v1687 = vlaneseq
    %v1688 = vand.u32 %v1687, 127
    %vm1690 = vcmp.lt.s32.totalorder %v1688, 27
    %v1691 = vsel %vm1690, %v1685, %v14
    %v1692 = vlaneseq
    %v1693 = vand.u32 %v1692, 127
    %1696 = xla_tuple %v1693, %v12
    %1697 = xla_tuple %1696
    %vm1698 = vcmp.lt.s32.totalorder %v1693, %v12
    %v1699 = vsel %vm1698, 1, 0
    %1700 = xla_tuple %v1699
    %1701 = xla_tuple %v1699, %v1691, %v19
    %1702 = xla_tuple %1701
    %v1703 = vsel %vm1698, %v1691, %v19
    %1704 = xla_tuple %v1703
    %s1705 = scalar_lea.vmem [#allocation7], 188
    %v1706 = vpack.c.bf16 0.0, %v1703
    %1708 = vst [vmem:[%s1705] sm:$0xf] %v1706
    %s1709 = scalar_lea.vmem %s4, 192
    %s1711 = sor.u32 255, 127
    %s1712 = sand.u32 %s1711, 85
    %s1713 = sshrl.u32 %s1712, 1
    %s1714 = sor.u32 %s1712, %s1713
    %s1715 = sand.u32 51, %s1714
    %s1716 = sshrl.u32 %s1715, 2
    %s1717 = sor.u32 %s1715, %s1716
    %s1718 = sand.u32 15, %s1717
    %v1719 = vld [vmem:[%s1709] sm:%s1718]
    %v1720 = vunpack.c.l.bf16 %v1719
    %v1721 = vunpack.c.h.bf16 %v1719
    %v1722 = vlaneseq
    %v1723 = vand.u32 %v1722, 127
    %vm1725 = vcmp.lt.s32.totalorder %v1723, 27
    %v1726 = vsel %vm1725, %v1720, %v14
    %v1727 = vlaneseq
    %v1728 = vand.u32 %v1727, 127
    %1731 = xla_tuple %v1728, %v12
    %1732 = xla_tuple %1731
    %vm1733 = vcmp.lt.s32.totalorder %v1728, %v12
    %v1734 = vsel %vm1733, 1, 0
    %1735 = xla_tuple %v1734
    %1736 = xla_tuple %v1734, %v1726, %v19
    %1737 = xla_tuple %1736
    %v1738 = vsel %vm1733, %v1726, %v19
    %1739 = xla_tuple %v1738
    %s1740 = scalar_lea.vmem [#allocation7], 192
    %v1741 = vpack.c.bf16 0.0, %v1738
    %1743 = vst [vmem:[%s1740] sm:$0xf] %v1741
    %s1744 = scalar_lea.vmem %s4, 196
    %s1746 = sor.u32 255, 127
    %s1747 = sand.u32 %s1746, 85
    %s1748 = sshrl.u32 %s1747, 1
    %s1749 = sor.u32 %s1747, %s1748
    %s1750 = sand.u32 51, %s1749
    %s1751 = sshrl.u32 %s1750, 2
    %s1752 = sor.u32 %s1750, %s1751
    %s1753 = sand.u32 15, %s1752
    %v1754 = vld [vmem:[%s1744] sm:%s1753]
    %v1755 = vunpack.c.l.bf16 %v1754
    %v1756 = vunpack.c.h.bf16 %v1754
    %v1757 = vlaneseq
    %v1758 = vand.u32 %v1757, 127
    %vm1760 = vcmp.lt.s32.totalorder %v1758, 27
    %v1761 = vsel %vm1760, %v1755, %v14
    %v1762 = vlaneseq
    %v1763 = vand.u32 %v1762, 127
    %1766 = xla_tuple %v1763, %v12
    %1767 = xla_tuple %1766
    %vm1768 = vcmp.lt.s32.totalorder %v1763, %v12
    %v1769 = vsel %vm1768, 1, 0
    %1770 = xla_tuple %v1769
    %1771 = xla_tuple %v1769, %v1761, %v19
    %1772 = xla_tuple %1771
    %v1773 = vsel %vm1768, %v1761, %v19
    %1774 = xla_tuple %v1773
    %s1775 = scalar_lea.vmem [#allocation7], 196
    %v1776 = vpack.c.bf16 0.0, %v1773
    %1778 = vst [vmem:[%s1775] sm:$0xf] %v1776
    %s1779 = scalar_lea.vmem %s4, 200
    %s1781 = sor.u32 255, 127
    %s1782 = sand.u32 %s1781, 85
    %s1783 = sshrl.u32 %s1782, 1
    %s1784 = sor.u32 %s1782, %s1783
    %s1785 = sand.u32 51, %s1784
    %s1786 = sshrl.u32 %s1785, 2
    %s1787 = sor.u32 %s1785, %s1786
    %s1788 = sand.u32 15, %s1787
    %v1789 = vld [vmem:[%s1779] sm:%s1788]
    %v1790 = vunpack.c.l.bf16 %v1789
    %v1791 = vunpack.c.h.bf16 %v1789
    %v1792 = vlaneseq
    %v1793 = vand.u32 %v1792, 127
    %vm1795 = vcmp.lt.s32.totalorder %v1793, 27
    %v1796 = vsel %vm1795, %v1790, %v14
    %v1797 = vlaneseq
    %v1798 = vand.u32 %v1797, 127
    %1801 = xla_tuple %v1798, %v12
    %1802 = xla_tuple %1801
    %vm1803 = vcmp.lt.s32.totalorder %v1798, %v12
    %v1804 = vsel %vm1803, 1, 0
    %1805 = xla_tuple %v1804
    %1806 = xla_tuple %v1804, %v1796, %v19
    %1807 = xla_tuple %1806
    %v1808 = vsel %vm1803, %v1796, %v19
    %1809 = xla_tuple %v1808
    %s1810 = scalar_lea.vmem [#allocation7], 200
    %v1811 = vpack.c.bf16 0.0, %v1808
    %1813 = vst [vmem:[%s1810] sm:$0xf] %v1811
    %s1814 = scalar_lea.vmem %s4, 204
    %s1816 = sor.u32 255, 127
    %s1817 = sand.u32 %s1816, 85
    %s1818 = sshrl.u32 %s1817, 1
    %s1819 = sor.u32 %s1817, %s1818
    %s1820 = sand.u32 51, %s1819
    %s1821 = sshrl.u32 %s1820, 2
    %s1822 = sor.u32 %s1820, %s1821
    %s1823 = sand.u32 15, %s1822
    %v1824 = vld [vmem:[%s1814] sm:%s1823]
    %v1825 = vunpack.c.l.bf16 %v1824
    %v1826 = vunpack.c.h.bf16 %v1824
    %v1827 = vlaneseq
    %v1828 = vand.u32 %v1827, 127
    %vm1830 = vcmp.lt.s32.totalorder %v1828, 27
    %v1831 = vsel %vm1830, %v1825, %v14
    %v1832 = vlaneseq
    %v1833 = vand.u32 %v1832, 127
    %1836 = xla_tuple %v1833, %v12
    %1837 = xla_tuple %1836
    %vm1838 = vcmp.lt.s32.totalorder %v1833, %v12
    %v1839 = vsel %vm1838, 1, 0
    %1840 = xla_tuple %v1839
    %1841 = xla_tuple %v1839, %v1831, %v19
    %1842 = xla_tuple %1841
    %v1843 = vsel %vm1838, %v1831, %v19
    %1844 = xla_tuple %v1843
    %s1845 = scalar_lea.vmem [#allocation7], 204
    %v1846 = vpack.c.bf16 0.0, %v1843
    %1848 = vst [vmem:[%s1845] sm:$0xf] %v1846
    %s1849 = scalar_lea.vmem %s4, 208
    %s1851 = sor.u32 255, 127
    %s1852 = sand.u32 %s1851, 85
    %s1853 = sshrl.u32 %s1852, 1
    %s1854 = sor.u32 %s1852, %s1853
    %s1855 = sand.u32 51, %s1854
    %s1856 = sshrl.u32 %s1855, 2
    %s1857 = sor.u32 %s1855, %s1856
    %s1858 = sand.u32 15, %s1857
    %v1859 = vld [vmem:[%s1849] sm:%s1858]
    %v1860 = vunpack.c.l.bf16 %v1859
    %v1861 = vunpack.c.h.bf16 %v1859
    %v1862 = vlaneseq
    %v1863 = vand.u32 %v1862, 127
    %vm1865 = vcmp.lt.s32.totalorder %v1863, 27
    %v1866 = vsel %vm1865, %v1860, %v14
    %v1867 = vlaneseq
    %v1868 = vand.u32 %v1867, 127
    %1871 = xla_tuple %v1868, %v12
    %1872 = xla_tuple %1871
    %vm1873 = vcmp.lt.s32.totalorder %v1868, %v12
    %v1874 = vsel %vm1873, 1, 0
    %1875 = xla_tuple %v1874
    %1876 = xla_tuple %v1874, %v1866, %v19
    %1877 = xla_tuple %1876
    %v1878 = vsel %vm1873, %v1866, %v19
    %1879 = xla_tuple %v1878
    %s1880 = scalar_lea.vmem [#allocation7], 208
    %v1881 = vpack.c.bf16 0.0, %v1878
    %1883 = vst [vmem:[%s1880] sm:$0xf] %v1881
    %s1884 = scalar_lea.vmem %s4, 212
    %s1886 = sor.u32 255, 127
    %s1887 = sand.u32 %s1886, 85
    %s1888 = sshrl.u32 %s1887, 1
    %s1889 = sor.u32 %s1887, %s1888
    %s1890 = sand.u32 51, %s1889
    %s1891 = sshrl.u32 %s1890, 2
    %s1892 = sor.u32 %s1890, %s1891
    %s1893 = sand.u32 15, %s1892
    %v1894 = vld [vmem:[%s1884] sm:%s1893]
    %v1895 = vunpack.c.l.bf16 %v1894
    %v1896 = vunpack.c.h.bf16 %v1894
    %v1897 = vlaneseq
    %v1898 = vand.u32 %v1897, 127
    %vm1900 = vcmp.lt.s32.totalorder %v1898, 27
    %v1901 = vsel %vm1900, %v1895, %v14
    %v1902 = vlaneseq
    %v1903 = vand.u32 %v1902, 127
    %1906 = xla_tuple %v1903, %v12
    %1907 = xla_tuple %1906
    %vm1908 = vcmp.lt.s32.totalorder %v1903, %v12
    %v1909 = vsel %vm1908, 1, 0
    %1910 = xla_tuple %v1909
    %1911 = xla_tuple %v1909, %v1901, %v19
    %1912 = xla_tuple %1911
    %v1913 = vsel %vm1908, %v1901, %v19
    %1914 = xla_tuple %v1913
    %s1915 = scalar_lea.vmem [#allocation7], 212
    %v1916 = vpack.c.bf16 0.0, %v1913
    %1918 = vst [vmem:[%s1915] sm:$0xf] %v1916
    %s1919 = scalar_lea.vmem %s4, 216
    %s1921 = sor.u32 255, 127
    %s1922 = sand.u32 %s1921, 85
    %s1923 = sshrl.u32 %s1922, 1
    %s1924 = sor.u32 %s1922, %s1923
    %s1925 = sand.u32 51, %s1924
    %s1926 = sshrl.u32 %s1925, 2
    %s1927 = sor.u32 %s1925, %s1926
    %s1928 = sand.u32 15, %s1927
    %v1929 = vld [vmem:[%s1919] sm:%s1928]
    %v1930 = vunpack.c.l.bf16 %v1929
    %v1931 = vunpack.c.h.bf16 %v1929
    %v1932 = vlaneseq
    %v1933 = vand.u32 %v1932, 127
    %vm1935 = vcmp.lt.s32.totalorder %v1933, 27
    %v1936 = vsel %vm1935, %v1930, %v14
    %v1937 = vlaneseq
    %v1938 = vand.u32 %v1937, 127
    %1941 = xla_tuple %v1938, %v12
    %1942 = xla_tuple %1941
    %vm1943 = vcmp.lt.s32.totalorder %v1938, %v12
    %v1944 = vsel %vm1943, 1, 0
    %1945 = xla_tuple %v1944
    %1946 = xla_tuple %v1944, %v1936, %v19
    %1947 = xla_tuple %1946
    %v1948 = vsel %vm1943, %v1936, %v19
    %1949 = xla_tuple %v1948
    %s1950 = scalar_lea.vmem [#allocation7], 216
    %v1951 = vpack.c.bf16 0.0, %v1948
    %1953 = vst [vmem:[%s1950] sm:$0xf] %v1951
    %s1954 = scalar_lea.vmem %s4, 220
    %s1956 = sor.u32 255, 127
    %s1957 = sand.u32 %s1956, 85
    %s1958 = sshrl.u32 %s1957, 1
    %s1959 = sor.u32 %s1957, %s1958
    %s1960 = sand.u32 51, %s1959
    %s1961 = sshrl.u32 %s1960, 2
    %s1962 = sor.u32 %s1960, %s1961
    %s1963 = sand.u32 15, %s1962
    %v1964 = vld [vmem:[%s1954] sm:%s1963]
    %v1965 = vunpack.c.l.bf16 %v1964
    %v1966 = vunpack.c.h.bf16 %v1964
    %v1967 = vlaneseq
    %v1968 = vand.u32 %v1967, 127
    %vm1970 = vcmp.lt.s32.totalorder %v1968, 27
    %v1971 = vsel %vm1970, %v1965, %v14
    %v1972 = vlaneseq
    %v1973 = vand.u32 %v1972, 127
    %1976 = xla_tuple %v1973, %v12
    %1977 = xla_tuple %1976
    %vm1978 = vcmp.lt.s32.totalorder %v1973, %v12
    %v1979 = vsel %vm1978, 1, 0
    %1980 = xla_tuple %v1979
    %1981 = xla_tuple %v1979, %v1971, %v19
    %1982 = xla_tuple %1981
    %v1983 = vsel %vm1978, %v1971, %v19
    %1984 = xla_tuple %v1983
    %s1985 = scalar_lea.vmem [#allocation7], 220
    %v1986 = vpack.c.bf16 0.0, %v1983
    %1988 = vst [vmem:[%s1985] sm:$0xf] %v1986
    %s1989 = scalar_lea.vmem %s4, 224
    %s1991 = sor.u32 255, 127
    %s1992 = sand.u32 %s1991, 85
    %s1993 = sshrl.u32 %s1992, 1
    %s1994 = sor.u32 %s1992, %s1993
    %s1995 = sand.u32 51, %s1994
    %s1996 = sshrl.u32 %s1995, 2
    %s1997 = sor.u32 %s1995, %s1996
    %s1998 = sand.u32 15, %s1997
    %v1999 = vld [vmem:[%s1989] sm:%s1998]
    %v2000 = vunpack.c.l.bf16 %v1999
    %v2001 = vunpack.c.h.bf16 %v1999
    %v2002 = vlaneseq
    %v2003 = vand.u32 %v2002, 127
    %vm2005 = vcmp.lt.s32.totalorder %v2003, 27
    %v2006 = vsel %vm2005, %v2000, %v14
    %v2007 = vlaneseq
    %v2008 = vand.u32 %v2007, 127
    %2011 = xla_tuple %v2008, %v12
    %2012 = xla_tuple %2011
    %vm2013 = vcmp.lt.s32.totalorder %v2008, %v12
    %v2014 = vsel %vm2013, 1, 0
    %2015 = xla_tuple %v2014
    %2016 = xla_tuple %v2014, %v2006, %v19
    %2017 = xla_tuple %2016
    %v2018 = vsel %vm2013, %v2006, %v19
    %2019 = xla_tuple %v2018
    %s2020 = scalar_lea.vmem [#allocation7], 224
    %v2021 = vpack.c.bf16 0.0, %v2018
    %2023 = vst [vmem:[%s2020] sm:$0xf] %v2021
    %s2024 = scalar_lea.vmem %s4, 228
    %s2026 = sor.u32 255, 127
    %s2027 = sand.u32 %s2026, 85
    %s2028 = sshrl.u32 %s2027, 1
    %s2029 = sor.u32 %s2027, %s2028
    %s2030 = sand.u32 51, %s2029
    %s2031 = sshrl.u32 %s2030, 2
    %s2032 = sor.u32 %s2030, %s2031
    %s2033 = sand.u32 15, %s2032
    %v2034 = vld [vmem:[%s2024] sm:%s2033]
    %v2035 = vunpack.c.l.bf16 %v2034
    %v2036 = vunpack.c.h.bf16 %v2034
    %v2037 = vlaneseq
    %v2038 = vand.u32 %v2037, 127
    %vm2040 = vcmp.lt.s32.totalorder %v2038, 27
    %v2041 = vsel %vm2040, %v2035, %v14
    %v2042 = vlaneseq
    %v2043 = vand.u32 %v2042, 127
    %2046 = xla_tuple %v2043, %v12
    %2047 = xla_tuple %2046
    %vm2048 = vcmp.lt.s32.totalorder %v2043, %v12
    %v2049 = vsel %vm2048, 1, 0
    %2050 = xla_tuple %v2049
    %2051 = xla_tuple %v2049, %v2041, %v19
    %2052 = xla_tuple %2051
    %v2053 = vsel %vm2048, %v2041, %v19
    %2054 = xla_tuple %v2053
    %s2055 = scalar_lea.vmem [#allocation7], 228
    %v2056 = vpack.c.bf16 0.0, %v2053
    %2058 = vst [vmem:[%s2055] sm:$0xf] %v2056
    %s2059 = scalar_lea.vmem %s4, 232
    %s2061 = sor.u32 255, 127
    %s2062 = sand.u32 %s2061, 85
    %s2063 = sshrl.u32 %s2062, 1
    %s2064 = sor.u32 %s2062, %s2063
    %s2065 = sand.u32 51, %s2064
    %s2066 = sshrl.u32 %s2065, 2
    %s2067 = sor.u32 %s2065, %s2066
    %s2068 = sand.u32 15, %s2067
    %v2069 = vld [vmem:[%s2059] sm:%s2068]
    %v2070 = vunpack.c.l.bf16 %v2069
    %v2071 = vunpack.c.h.bf16 %v2069
    %v2072 = vlaneseq
    %v2073 = vand.u32 %v2072, 127
    %vm2075 = vcmp.lt.s32.totalorder %v2073, 27
    %v2076 = vsel %vm2075, %v2070, %v14
    %v2077 = vlaneseq
    %v2078 = vand.u32 %v2077, 127
    %2081 = xla_tuple %v2078, %v12
    %2082 = xla_tuple %2081
    %vm2083 = vcmp.lt.s32.totalorder %v2078, %v12
    %v2084 = vsel %vm2083, 1, 0
    %2085 = xla_tuple %v2084
    %2086 = xla_tuple %v2084, %v2076, %v19
    %2087 = xla_tuple %2086
    %v2088 = vsel %vm2083, %v2076, %v19
    %2089 = xla_tuple %v2088
    %s2090 = scalar_lea.vmem [#allocation7], 232
    %v2091 = vpack.c.bf16 0.0, %v2088
    %2093 = vst [vmem:[%s2090] sm:$0xf] %v2091
    %s2094 = scalar_lea.vmem %s4, 236
    %s2096 = sor.u32 255, 127
    %s2097 = sand.u32 %s2096, 85
    %s2098 = sshrl.u32 %s2097, 1
    %s2099 = sor.u32 %s2097, %s2098
    %s2100 = sand.u32 51, %s2099
    %s2101 = sshrl.u32 %s2100, 2
    %s2102 = sor.u32 %s2100, %s2101
    %s2103 = sand.u32 15, %s2102
    %v2104 = vld [vmem:[%s2094] sm:%s2103]
    %v2105 = vunpack.c.l.bf16 %v2104
    %v2106 = vunpack.c.h.bf16 %v2104
    %v2107 = vlaneseq
    %v2108 = vand.u32 %v2107, 127
    %vm2110 = vcmp.lt.s32.totalorder %v2108, 27
    %v2111 = vsel %vm2110, %v2105, %v14
    %v2112 = vlaneseq
    %v2113 = vand.u32 %v2112, 127
    %2116 = xla_tuple %v2113, %v12
    %2117 = xla_tuple %2116
    %vm2118 = vcmp.lt.s32.totalorder %v2113, %v12
    %v2119 = vsel %vm2118, 1, 0
    %2120 = xla_tuple %v2119
    %2121 = xla_tuple %v2119, %v2111, %v19
    %2122 = xla_tuple %2121
    %v2123 = vsel %vm2118, %v2111, %v19
    %2124 = xla_tuple %v2123
    %s2125 = scalar_lea.vmem [#allocation7], 236
    %v2126 = vpack.c.bf16 0.0, %v2123
    %2128 = vst [vmem:[%s2125] sm:$0xf] %v2126
    %s2129 = scalar_lea.vmem %s4, 240
    %s2131 = sor.u32 255, 127
    %s2132 = sand.u32 %s2131, 85
    %s2133 = sshrl.u32 %s2132, 1
    %s2134 = sor.u32 %s2132, %s2133
    %s2135 = sand.u32 51, %s2134
    %s2136 = sshrl.u32 %s2135, 2
    %s2137 = sor.u32 %s2135, %s2136
    %s2138 = sand.u32 15, %s2137
    %v2139 = vld [vmem:[%s2129] sm:%s2138]
    %v2140 = vunpack.c.l.bf16 %v2139
    %v2141 = vunpack.c.h.bf16 %v2139
    %v2142 = vlaneseq
    %v2143 = vand.u32 %v2142, 127
    %vm2145 = vcmp.lt.s32.totalorder %v2143, 27
    %v2146 = vsel %vm2145, %v2140, %v14
    %v2147 = vlaneseq
    %v2148 = vand.u32 %v2147, 127
    %2151 = xla_tuple %v2148, %v12
    %2152 = xla_tuple %2151
    %vm2153 = vcmp.lt.s32.totalorder %v2148, %v12
    %v2154 = vsel %vm2153, 1, 0
    %2155 = xla_tuple %v2154
    %2156 = xla_tuple %v2154, %v2146, %v19
    %2157 = xla_tuple %2156
    %v2158 = vsel %vm2153, %v2146, %v19
    %2159 = xla_tuple %v2158
    %s2160 = scalar_lea.vmem [#allocation7], 240
    %v2161 = vpack.c.bf16 0.0, %v2158
    %2163 = vst [vmem:[%s2160] sm:$0xf] %v2161
    %s2164 = scalar_lea.vmem %s4, 244
    %s2166 = sor.u32 255, 127
    %s2167 = sand.u32 %s2166, 85
    %s2168 = sshrl.u32 %s2167, 1
    %s2169 = sor.u32 %s2167, %s2168
    %s2170 = sand.u32 51, %s2169
    %s2171 = sshrl.u32 %s2170, 2
    %s2172 = sor.u32 %s2170, %s2171
    %s2173 = sand.u32 15, %s2172
    %v2174 = vld [vmem:[%s2164] sm:%s2173]
    %v2175 = vunpack.c.l.bf16 %v2174
    %v2176 = vunpack.c.h.bf16 %v2174
    %v2177 = vlaneseq
    %v2178 = vand.u32 %v2177, 127
    %vm2180 = vcmp.lt.s32.totalorder %v2178, 27
    %v2181 = vsel %vm2180, %v2175, %v14
    %v2182 = vlaneseq
    %v2183 = vand.u32 %v2182, 127
    %2186 = xla_tuple %v2183, %v12
    %2187 = xla_tuple %2186
    %vm2188 = vcmp.lt.s32.totalorder %v2183, %v12
    %v2189 = vsel %vm2188, 1, 0
    %2190 = xla_tuple %v2189
    %2191 = xla_tuple %v2189, %v2181, %v19
    %2192 = xla_tuple %2191
    %v2193 = vsel %vm2188, %v2181, %v19
    %2194 = xla_tuple %v2193
    %s2195 = scalar_lea.vmem [#allocation7], 244
    %v2196 = vpack.c.bf16 0.0, %v2193
    %2198 = vst [vmem:[%s2195] sm:$0xf] %v2196
    %s2199 = scalar_lea.vmem %s4, 248
    %s2201 = sor.u32 255, 127
    %s2202 = sand.u32 %s2201, 85
    %s2203 = sshrl.u32 %s2202, 1
    %s2204 = sor.u32 %s2202, %s2203
    %s2205 = sand.u32 51, %s2204
    %s2206 = sshrl.u32 %s2205, 2
    %s2207 = sor.u32 %s2205, %s2206
    %s2208 = sand.u32 15, %s2207
    %v2209 = vld [vmem:[%s2199] sm:%s2208]
    %v2210 = vunpack.c.l.bf16 %v2209
    %v2211 = vunpack.c.h.bf16 %v2209
    %v2212 = vlaneseq
    %v2213 = vand.u32 %v2212, 127
    %vm2215 = vcmp.lt.s32.totalorder %v2213, 27
    %v2216 = vsel %vm2215, %v2210, %v14
    %v2217 = vlaneseq
    %v2218 = vand.u32 %v2217, 127
    %2221 = xla_tuple %v2218, %v12
    %2222 = xla_tuple %2221
    %vm2223 = vcmp.lt.s32.totalorder %v2218, %v12
    %v2224 = vsel %vm2223, 1, 0
    %2225 = xla_tuple %v2224
    %2226 = xla_tuple %v2224, %v2216, %v19
    %2227 = xla_tuple %2226
    %v2228 = vsel %vm2223, %v2216, %v19
    %2229 = xla_tuple %v2228
    %s2230 = scalar_lea.vmem [#allocation7], 248
    %v2231 = vpack.c.bf16 0.0, %v2228
    %2233 = vst [vmem:[%s2230] sm:$0xf] %v2231
    %s2234 = scalar_lea.vmem %s4, 252
    %s2236 = sor.u32 255, 127
    %s2237 = sand.u32 %s2236, 85
    %s2238 = sshrl.u32 %s2237, 1
    %s2239 = sor.u32 %s2237, %s2238
    %s2240 = sand.u32 51, %s2239
    %s2241 = sshrl.u32 %s2240, 2
    %s2242 = sor.u32 %s2240, %s2241
    %s2243 = sand.u32 15, %s2242
    %v2244 = vld [vmem:[%s2234] sm:%s2243]
    %v2245 = vunpack.c.l.bf16 %v2244
    %v2246 = vunpack.c.h.bf16 %v2244
    %v2247 = vlaneseq
    %v2248 = vand.u32 %v2247, 127
    %vm2250 = vcmp.lt.s32.totalorder %v2248, 27
    %v2251 = vsel %vm2250, %v2245, %v14
    %v2252 = vlaneseq
    %v2253 = vand.u32 %v2252, 127
    %2256 = xla_tuple %v2253, %v12
    %2257 = xla_tuple %2256
    %vm2258 = vcmp.lt.s32.totalorder %v2253, %v12
    %v2259 = vsel %vm2258, 1, 0
    %2260 = xla_tuple %v2259
    %2261 = xla_tuple %v2259, %v2251, %v19
    %2262 = xla_tuple %2261
    %v2263 = vsel %vm2258, %v2251, %v19
    %2264 = xla_tuple %v2263
    %s2265 = scalar_lea.vmem [#allocation7], 252
    %v2266 = vpack.c.bf16 0.0, %v2263
    %2268 = vst [vmem:[%s2265] sm:$0xf] %v2266
    %v2270 = vld [vmem:[#allocation7] sm:$0xf]
    %v2271 = vld [vmem:[#allocation7 + $0x4] sm:$0xf]
    %v2272 = vld [vmem:[#allocation7 + $0x8] sm:$0xf]
    %v2273 = vld [vmem:[#allocation7 + $0xc] sm:$0xf]
    %v2274 = vld [vmem:[#allocation7 + $0x10] sm:$0xf]
    %v2275 = vld [vmem:[#allocation7 + $0x14] sm:$0xf]
    %v2276 = vld [vmem:[#allocation7 + $0x18] sm:$0xf]
    %v2277 = vld [vmem:[#allocation7 + $0x1c] sm:$0xf]
    %v2278 = vld [vmem:[#allocation7 + $0x20] sm:$0xf]
    %v2279 = vld [vmem:[#allocation7 + $0x24] sm:$0xf]
    %v2280 = vld [vmem:[#allocation7 + $0x28] sm:$0xf]
    %v2281 = vld [vmem:[#allocation7 + $0x2c] sm:$0xf]
    %v2282 = vld [vmem:[#allocation7 + $0x30] sm:$0xf]
    %v2283 = vld [vmem:[#allocation7 + $0x34] sm:$0xf]
    %v2284 = vld [vmem:[#allocation7 + $0x38] sm:$0xf]
    %v2285 = vld [vmem:[#allocation7 + $0x3c] sm:$0xf]
    %v2286 = vld [vmem:[#allocation7 + $0x40] sm:$0xf]
    %v2287 = vld [vmem:[#allocation7 + $0x44] sm:$0xf]
    %v2288 = vld [vmem:[#allocation7 + $0x48] sm:$0xf]
    %v2289 = vld [vmem:[#allocation7 + $0x4c] sm:$0xf]
    %v2290 = vld [vmem:[#allocation7 + $0x50] sm:$0xf]
    %v2291 = vld [vmem:[#allocation7 + $0x54] sm:$0xf]
    %v2292 = vld [vmem:[#allocation7 + $0x58] sm:$0xf]
    %v2293 = vld [vmem:[#allocation7 + $0x5c] sm:$0xf]
    %v2294 = vld [vmem:[#allocation7 + $0x60] sm:$0xf]
    %v2295 = vld [vmem:[#allocation7 + $0x64] sm:$0xf]
    %v2296 = vld [vmem:[#allocation7 + $0x68] sm:$0xf]
    %v2297 = vld [vmem:[#allocation7 + $0x6c] sm:$0xf]
    %v2298 = vld [vmem:[#allocation7 + $0x70] sm:$0xf]
    %v2299 = vld [vmem:[#allocation7 + $0x74] sm:$0xf]
    %v2300 = vld [vmem:[#allocation7 + $0x78] sm:$0xf]
    %v2301 = vld [vmem:[#allocation7 + $0x7c] sm:$0xf]
    %v2302 = vld [vmem:[#allocation7 + $0x80] sm:$0xf]
    %v2303 = vld [vmem:[#allocation7 + $0x84] sm:$0xf]
    %v2304 = vld [vmem:[#allocation7 + $0x88] sm:$0xf]
    %v2305 = vld [vmem:[#allocation7 + $0x8c] sm:$0xf]
    %v2306 = vld [vmem:[#allocation7 + $0x90] sm:$0xf]
    %v2307 = vld [vmem:[#allocation7 + $0x94] sm:$0xf]
    %v2308 = vld [vmem:[#allocation7 + $0x98] sm:$0xf]
    %v2309 = vld [vmem:[#allocation7 + $0x9c] sm:$0xf]
    %v2310 = vld [vmem:[#allocation7 + $0xa0] sm:$0xf]
    %v2311 = vld [vmem:[#allocation7 + $0xa4] sm:$0xf]
    %v2312 = vld [vmem:[#allocation7 + $0xa8] sm:$0xf]
    %v2313 = vld [vmem:[#allocation7 + $0xac] sm:$0xf]
    %v2314 = vld [vmem:[#allocation7 + $0xb0] sm:$0xf]
    %v2315 = vld [vmem:[#allocation7 + $0xb4] sm:$0xf]
    %v2316 = vld [vmem:[#allocation7 + $0xb8] sm:$0xf]
    %v2317 = vld [vmem:[#allocation7 + $0xbc] sm:$0xf]
    %v2318 = vld [vmem:[#allocation7 + $0xc0] sm:$0xf]
    %v2319 = vld [vmem:[#allocation7 + $0xc4] sm:$0xf]
    %v2320 = vld [vmem:[#allocation7 + $0xc8] sm:$0xf]
    %v2321 = vld [vmem:[#allocation7 + $0xcc] sm:$0xf]
    %v2322 = vld [vmem:[#allocation7 + $0xd0] sm:$0xf]
    %v2323 = vld [vmem:[#allocation7 + $0xd4] sm:$0xf]
    %v2324 = vld [vmem:[#allocation7 + $0xd8] sm:$0xf]
    %v2325 = vld [vmem:[#allocation7 + $0xdc] sm:$0xf]
    %v2326 = vld [vmem:[#allocation7 + $0xe0] sm:$0xf]
    %v2327 = vld [vmem:[#allocation7 + $0xe4] sm:$0xf]
    %v2328 = vld [vmem:[#allocation7 + $0xe8] sm:$0xf]
    %v2329 = vld [vmem:[#allocation7 + $0xec] sm:$0xf]
    %v2330 = vld [vmem:[#allocation7 + $0xf0] sm:$0xf]
    %v2331 = vld [vmem:[#allocation7 + $0xf4] sm:$0xf]
    %v2332 = vld [vmem:[#allocation7 + $0xf8] sm:$0xf]
    %v2333 = vld [vmem:[#allocation7 + $0xfc] sm:$0xf]
    %v2334 = vld [vmem:[%s0] sm:$0xf]
    %v2335 = vld [vmem:[%s0 + $0x4] sm:$0xf]
    %v2336 = vld [vmem:[%s0 + $0x8] sm:$0xf]
    %v2337 = vld [vmem:[%s0 + $0xc] sm:$0xf]
    %v2402 = vunpack.c.l.b16 %v2270
    %v2403 = vunpack.c.l.b16 %v2271
    %v2404 = vunpack.c.l.b16 %v2272
    %v2405 = vunpack.c.l.b16 %v2273
    %v2406 = vunpack.c.l.b16 %v2274
    %v2407 = vunpack.c.l.b16 %v2275
    %v2408 = vunpack.c.l.b16 %v2276
    %v2409 = vunpack.c.l.b16 %v2277
    %v2410 = vunpack.c.l.b16 %v2278
    %v2411 = vunpack.c.l.b16 %v2279
    %v2412 = vunpack.c.l.b16 %v2280
    %v2413 = vunpack.c.l.b16 %v2281
    %v2414 = vunpack.c.l.b16 %v2282
    %v2415 = vunpack.c.l.b16 %v2283
    %v2416 = vunpack.c.l.b16 %v2284
    %v2417 = vunpack.c.l.b16 %v2285
    %v2418 = vunpack.c.l.b16 %v2286
    %v2419 = vunpack.c.l.b16 %v2287
    %v2420 = vunpack.c.l.b16 %v2288
    %v2421 = vunpack.c.l.b16 %v2289
    %v2422 = vunpack.c.l.b16 %v2290
    %v2423 = vunpack.c.l.b16 %v2291
    %v2424 = vunpack.c.l.b16 %v2292
    %v2425 = vunpack.c.l.b16 %v2293
    %v2426 = vunpack.c.l.b16 %v2294
    %v2427 = vunpack.c.l.b16 %v2295
    %v2428 = vunpack.c.l.b16 %v2296
    %v2429 = vunpack.c.l.b16 %v2297
    %v2430 = vunpack.c.l.b16 %v2298
    %v2431 = vunpack.c.l.b16 %v2299
    %v2432 = vunpack.c.l.b16 %v2300
    %v2433 = vunpack.c.l.b16 %v2301
    %v2434 = vunpack.c.l.b16 %v2302
    %v2435 = vunpack.c.l.b16 %v2303
    %v2436 = vunpack.c.l.b16 %v2304
    %v2437 = vunpack.c.l.b16 %v2305
    %v2438 = vunpack.c.l.b16 %v2306
    %v2439 = vunpack.c.l.b16 %v2307
    %v2440 = vunpack.c.l.b16 %v2308
    %v2441 = vunpack.c.l.b16 %v2309
    %v2442 = vunpack.c.l.b16 %v2310
    %v2443 = vunpack.c.l.b16 %v2311
    %v2444 = vunpack.c.l.b16 %v2312
    %v2445 = vunpack.c.l.b16 %v2313
    %v2446 = vunpack.c.l.b16 %v2314
    %v2447 = vunpack.c.l.b16 %v2315
    %v2448 = vunpack.c.l.b16 %v2316
    %v2449 = vunpack.c.l.b16 %v2317
    %v2450 = vunpack.c.l.b16 %v2318
    %v2451 = vunpack.c.l.b16 %v2319
    %v2452 = vunpack.c.l.b16 %v2320
    %v2453 = vunpack.c.l.b16 %v2321
    %v2454 = vunpack.c.l.b16 %v2322
    %v2455 = vunpack.c.l.b16 %v2323
    %v2456 = vunpack.c.l.b16 %v2324
    %v2457 = vunpack.c.l.b16 %v2325
    %v2458 = vunpack.c.l.b16 %v2326
    %v2459 = vunpack.c.l.b16 %v2327
    %v2460 = vunpack.c.l.b16 %v2328
    %v2461 = vunpack.c.l.b16 %v2329
    %v2462 = vunpack.c.l.b16 %v2330
    %v2463 = vunpack.c.l.b16 %v2331
    %v2464 = vunpack.c.l.b16 %v2332
    %v2465 = vunpack.c.l.b16 %v2333
    %v2466 = vpack.c.b16 %v2403, %v2402
    %v2467 = vpack.c.b16 %v2405, %v2404
    %v2468 = vpack.c.b16 %v2407, %v2406
    %v2469 = vpack.c.b16 %v2409, %v2408
    %v2470 = vpack.c.b16 %v2411, %v2410
    %v2471 = vpack.c.b16 %v2413, %v2412
    %v2472 = vpack.c.b16 %v2415, %v2414
    %v2473 = vpack.c.b16 %v2417, %v2416
    %v2474 = vpack.c.b16 %v2419, %v2418
    %v2475 = vpack.c.b16 %v2421, %v2420
    %v2476 = vpack.c.b16 %v2423, %v2422
    %v2477 = vpack.c.b16 %v2425, %v2424
    %v2478 = vpack.c.b16 %v2427, %v2426
    %v2479 = vpack.c.b16 %v2429, %v2428
    %v2480 = vpack.c.b16 %v2431, %v2430
    %v2481 = vpack.c.b16 %v2433, %v2432
    %v2482 = vpack.c.b16 %v2435, %v2434
    %v2483 = vpack.c.b16 %v2437, %v2436
    %v2484 = vpack.c.b16 %v2439, %v2438
    %v2485 = vpack.c.b16 %v2441, %v2440
    %v2486 = vpack.c.b16 %v2443, %v2442
    %v2487 = vpack.c.b16 %v2445, %v2444
    %v2488 = vpack.c.b16 %v2447, %v2446
    %v2489 = vpack.c.b16 %v2449, %v2448
    %v2490 = vpack.c.b16 %v2451, %v2450
    %v2491 = vpack.c.b16 %v2453, %v2452
    %v2492 = vpack.c.b16 %v2455, %v2454
    %v2493 = vpack.c.b16 %v2457, %v2456
    %v2494 = vpack.c.b16 %v2459, %v2458
    %v2495 = vpack.c.b16 %v2461, %v2460
    %v2496 = vpack.c.b16 %v2463, %v2462
    %v2497 = vpack.c.b16 %v2465, %v2464
    %v2502 = vunpack.c.l.b16 %v2334
    %v2503 = vunpack.c.l.b16 %v2335
    %v2504 = vunpack.c.l.b16 %v2336
    %v2505 = vunpack.c.l.b16 %v2337
    %v2506 = vpack.c.b16 %v2503, %v2502
    %v2507 = vpack.c.b16 %v2505, %v2504
    %vm2510 = vcmask 261120
    %v2512 = vsel %vm2510, %v2466, 0
    %v2515 = vsel %vm2510, %v2467, 0
    %v2518 = vsel %vm2510, %v2468, 0
    %v2521 = vsel %vm2510, %v2469, 0
    %v2524 = vsel %vm2510, %v2470, 0
    %v2527 = vsel %vm2510, %v2471, 0
    %v2530 = vsel %vm2510, %v2472, 0
    %v2533 = vsel %vm2510, %v2473, 0
    %v2536 = vsel %vm2510, %v2474, 0
    %v2539 = vsel %vm2510, %v2475, 0
    %v2542 = vsel %vm2510, %v2476, 0
    %v2545 = vsel %vm2510, %v2477, 0
    %v2548 = vsel %vm2510, %v2478, 0
    %v2551 = vsel %vm2510, %v2479, 0
    %v2554 = vsel %vm2510, %v2480, 0
    %v2557 = vsel %vm2510, %v2481, 0
    %v2560 = vsel %vm2510, %v2482, 0
    %v2563 = vsel %vm2510, %v2483, 0
    %v2566 = vsel %vm2510, %v2484, 0
    %v2569 = vsel %vm2510, %v2485, 0
    %v2572 = vsel %vm2510, %v2486, 0
    %v2575 = vsel %vm2510, %v2487, 0
    %v2578 = vsel %vm2510, %v2488, 0
    %v2581 = vsel %vm2510, %v2489, 0
    %v2584 = vsel %vm2510, %v2490, 0
    %v2587 = vsel %vm2510, %v2491, 0
    %v2590 = vsel %vm2510, %v2492, 0
    %v2593 = vsel %vm2510, %v2493, 0
    %v2596 = vsel %vm2510, %v2494, 0
    %v2599 = vsel %vm2510, %v2495, 0
    %v2602 = vsel %vm2510, %v2496, 0
    %v2605 = vsel %vm2510, %v2497, 0
    %2607 = vmatprep.subr.bf16.mxu0 0
    %2608 = vmatpush1.bf16.msra.mxu0 %v2506
    %2609 = vmatprep.subr.bf16.mxu0 0
    %2610 = vmatpush1.bf16.msra.mxu0 %v2507
    %2611 = vmatprep.subr.bf16.mxu0 0
    %2612 = vmatpush1.bf16.msra.mxu0 0
    %2613 = vmatprep.subr.bf16.mxu0 0
    %2614 = vmatpush1.bf16.msra.mxu0 0
    %2615 = vmatprep.subr.bf16.mxu0 0
    %2616 = vmatpush1.bf16.msra.mxu0 0
    %2617 = vmatprep.subr.bf16.mxu0 0
    %2618 = vmatpush1.bf16.msra.mxu0 0
    %2619 = vmatprep.subr.bf16.mxu0 0
    %2620 = vmatpush1.bf16.msra.mxu0 0
    %2621 = vmatprep.subr.bf16.mxu0 0
    %2622 = vmatpush1.bf16.msra.mxu0 0
    %2623 = vmatprep.subr.bf16.mxu0 0
    %2624 = vmatpush1.bf16.msra.mxu0 0
    %2625 = vmatprep.subr.bf16.mxu0 0
    %2626 = vmatpush1.bf16.msra.mxu0 0
    %2627 = vmatprep.subr.bf16.mxu0 0
    %2628 = vmatpush1.bf16.msra.mxu0 0
    %2629 = vmatprep.subr.bf16.mxu0 0
    %2630 = vmatpush1.bf16.msra.mxu0 0
    %2631 = vmatprep.subr.bf16.mxu0 0
    %2632 = vmatpush1.bf16.msra.mxu0 0
    %2633 = vmatprep.subr.bf16.mxu0 0
    %2634 = vmatpush1.bf16.msra.mxu0 0
    %2635 = vmatprep.subr.bf16.mxu0 0
    %2636 = vmatpush1.bf16.msra.mxu0 0
    %2637 = vmatprep.subr.bf16.mxu0 0
    %2638 = vmatpush1.bf16.msra.mxu0 0
    %2639 = vmatprep.mubr.bf16.mxu0 0
    %2640 = vmatmul.mubr.bf16.gmra.mrb[0].mxu0 %v2512
    %v2641 = vpop.f32.mrb[0].mxu0
    %v2642 = vadd.f32 0.0, %v2641
    %v2643 = vpop.f32.mrb[0].mxu0
    %v2644 = vpop.f32.mrb[0].mxu0
    %v2645 = vadd.f32 0.0, %v2644
    %v2646 = vpop.f32.mrb[0].mxu0
    %2647 = vmatprep.mubr.bf16.mxu0 0
    %2648 = vmatmul.mubr.bf16.gmra.mrb[0].mxu0 %v2515
    %v2649 = vpop.f32.mrb[0].mxu0
    %v2650 = vadd.f32 0.0, %v2649
    %v2651 = vpop.f32.mrb[0].mxu0
    %v2652 = vpop.f32.mrb[0].mxu0
    %v2653 = vadd.f32 0.0, %v2652
    %v2654 = vpop.f32.mrb[0].mxu0
    %2655 = vmatprep.mubr.bf16.mxu0 0
    %2656 = vmatmul.mubr.bf16.gmra.mrb[0].mxu0 %v2518
    %v2657 = vpop.f32.mrb[0].mxu0
    %v2658 = vadd.f32 0.0, %v2657
    %v2659 = vpop.f32.mrb[0].mxu0
    %v2660 = vpop.f32.mrb[0].mxu0
    %v2661 = vadd.f32 0.0, %v2660
    %v2662 = vpop.f32.mrb[0].mxu0
    %2663 = vmatprep.mubr.bf16.mxu0 0
    %2664 = vmatmul.mubr.bf16.gmra.mrb[0].mxu0 %v2521
    %v2665 = vpop.f32.mrb[0].mxu0
    %v2666 = vadd.f32 0.0, %v2665
    %v2667 = vpop.f32.mrb[0].mxu0
    %v2668 = vpop.f32.mrb[0].mxu0
    %v2669 = vadd.f32 0.0, %v2668
    %v2670 = vpop.f32.mrb[0].mxu0
    %2671 = vmatprep.mubr.bf16.mxu0 0
    %2672 = vmatmul.mubr.bf16.gmra.mrb[0].mxu0 %v2524
    %v2673 = vpop.f32.mrb[0].mxu0
    %v2674 = vadd.f32 0.0, %v2673
    %v2675 = vpop.f32.mrb[0].mxu0
    %v2676 = vpop.f32.mrb[0].mxu0
    %v2677 = vadd.f32 0.0, %v2676
    %v2678 = vpop.f32.mrb[0].mxu0
    %2679 = vmatprep.mubr.bf16.mxu0 0
    %2680 = vmatmul.mubr.bf16.gmra.mrb[0].mxu0 %v2527
    %v2681 = vpop.f32.mrb[0].mxu0
    %v2682 = vadd.f32 0.0, %v2681
    %v2683 = vpop.f32.mrb[0].mxu0
    %v2684 = vpop.f32.mrb[0].mxu0
    %v2685 = vadd.f32 0.0, %v2684
    %v2686 = vpop.f32.mrb[0].mxu0
    %2687 = vmatprep.mubr.bf16.mxu0 0
    %2688 = vmatmul.mubr.bf16.gmra.mrb[0].mxu0 %v2530
    %v2689 = vpop.f32.mrb[0].mxu0
    %v2690 = vadd.f32 0.0, %v2689
    %v2691 = vpop.f32.mrb[0].mxu0
    %v2692 = vpop.f32.mrb[0].mxu0
    %v2693 = vadd.f32 0.0, %v2692
    %v2694 = vpop.f32.mrb[0].mxu0
    %2695 = vmatprep.mubr.bf16.mxu0 0
    %2696 = vmatmul.mubr.bf16.gmra.mrb[0].mxu0 %v2533
    %v2697 = vpop.f32.mrb[0].mxu0
    %v2698 = vadd.f32 0.0, %v2697
    %v2699 = vpop.f32.mrb[0].mxu0
    %v2700 = vpop.f32.mrb[0].mxu0
    %v2701 = vadd.f32 0.0, %v2700
    %v2702 = vpop.f32.mrb[0].mxu0
    %2703 = vmatprep.mubr.bf16.mxu0 0
    %2704 = vmatmul.mubr.bf16.gmra.mrb[0].mxu0 %v2536
    %v2705 = vpop.f32.mrb[0].mxu0
    %v2706 = vadd.f32 0.0, %v2705
    %v2707 = vpop.f32.mrb[0].mxu0
    %v2708 = vpop.f32.mrb[0].mxu0
    %v2709 = vadd.f32 0.0, %v2708
    %v2710 = vpop.f32.mrb[0].mxu0
    %2711 = vmatprep.mubr.bf16.mxu0 0
    %2712 = vmatmul.mubr.bf16.gmra.mrb[0].mxu0 %v2539
    %v2713 = vpop.f32.mrb[0].mxu0
    %v2714 = vadd.f32 0.0, %v2713
    %v2715 = vpop.f32.mrb[0].mxu0
    %v2716 = vpop.f32.mrb[0].mxu0
    %v2717 = vadd.f32 0.0, %v2716
    %v2718 = vpop.f32.mrb[0].mxu0
    %2719 = vmatprep.mubr.bf16.mxu0 0
    %2720 = vmatmul.mubr.bf16.gmra.mrb[0].mxu0 %v2542
    %v2721 = vpop.f32.mrb[0].mxu0
    %v2722 = vadd.f32 0.0, %v2721
    %v2723 = vpop.f32.mrb[0].mxu0
    %v2724 = vpop.f32.mrb[0].mxu0
    %v2725 = vadd.f32 0.0, %v2724
    %v2726 = vpop.f32.mrb[0].mxu0
    %2727 = vmatprep.mubr.bf16.mxu0 0
    %2728 = vmatmul.mubr.bf16.gmra.mrb[0].mxu0 %v2545
    %v2729 = vpop.f32.mrb[0].mxu0
    %v2730 = vadd.f32 0.0, %v2729
    %v2731 = vpop.f32.mrb[0].mxu0
    %v2732 = vpop.f32.mrb[0].mxu0
    %v2733 = vadd.f32 0.0, %v2732
    %v2734 = vpop.f32.mrb[0].mxu0
    %2735 = vmatprep.mubr.bf16.mxu0 0
    %2736 = vmatmul.mubr.bf16.gmra.mrb[0].mxu0 %v2548
    %v2737 = vpop.f32.mrb[0].mxu0
    %v2738 = vadd.f32 0.0, %v2737
    %v2739 = vpop.f32.mrb[0].mxu0
    %v2740 = vpop.f32.mrb[0].mxu0
    %v2741 = vadd.f32 0.0, %v2740
    %v2742 = vpop.f32.mrb[0].mxu0
    %2743 = vmatprep.mubr.bf16.mxu0 0
    %2744 = vmatmul.mubr.bf16.gmra.mrb[0].mxu0 %v2551
    %v2745 = vpop.f32.mrb[0].mxu0
    %v2746 = vadd.f32 0.0, %v2745
    %v2747 = vpop.f32.mrb[0].mxu0
    %v2748 = vpop.f32.mrb[0].mxu0
    %v2749 = vadd.f32 0.0, %v2748
    %v2750 = vpop.f32.mrb[0].mxu0
    %2751 = vmatprep.mubr.bf16.mxu0 0
    %2752 = vmatmul.mubr.bf16.gmra.mrb[0].mxu0 %v2554
    %v2753 = vpop.f32.mrb[0].mxu0
    %v2754 = vadd.f32 0.0, %v2753
    %v2755 = vpop.f32.mrb[0].mxu0
    %v2756 = vpop.f32.mrb[0].mxu0
    %v2757 = vadd.f32 0.0, %v2756
    %v2758 = vpop.f32.mrb[0].mxu0
    %2759 = vmatprep.mubr.bf16.mxu0 0
    %2760 = vmatmul.mubr.bf16.gmra.mrb[0].mxu0 %v2557
    %v2761 = vpop.f32.mrb[0].mxu0
    %v2762 = vadd.f32 0.0, %v2761
    %v2763 = vpop.f32.mrb[0].mxu0
    %v2764 = vpop.f32.mrb[0].mxu0
    %v2765 = vadd.f32 0.0, %v2764
    %v2766 = vpop.f32.mrb[0].mxu0
    %2767 = vmatprep.mubr.bf16.mxu0 0
    %2768 = vmatmul.mubr.bf16.gmra.mrb[0].mxu0 %v2560
    %v2769 = vpop.f32.mrb[0].mxu0
    %v2770 = vadd.f32 0.0, %v2769
    %v2771 = vpop.f32.mrb[0].mxu0
    %v2772 = vpop.f32.mrb[0].mxu0
    %v2773 = vadd.f32 0.0, %v2772
    %v2774 = vpop.f32.mrb[0].mxu0
    %2775 = vmatprep.mubr.bf16.mxu0 0
    %2776 = vmatmul.mubr.bf16.gmra.mrb[0].mxu0 %v2563
    %v2777 = vpop.f32.mrb[0].mxu0
    %v2778 = vadd.f32 0.0, %v2777
    %v2779 = vpop.f32.mrb[0].mxu0
    %v2780 = vpop.f32.mrb[0].mxu0
    %v2781 = vadd.f32 0.0, %v2780
    %v2782 = vpop.f32.mrb[0].mxu0
    %2783 = vmatprep.mubr.bf16.mxu0 0
    %2784 = vmatmul.mubr.bf16.gmra.mrb[0].mxu0 %v2566
    %v2785 = vpop.f32.mrb[0].mxu0
    %v2786 = vadd.f32 0.0, %v2785
    %v2787 = vpop.f32.mrb[0].mxu0
    %v2788 = vpop.f32.mrb[0].mxu0
    %v2789 = vadd.f32 0.0, %v2788
    %v2790 = vpop.f32.mrb[0].mxu0
    %2791 = vmatprep.mubr.bf16.mxu0 0
    %2792 = vmatmul.mubr.bf16.gmra.mrb[0].mxu0 %v2569
    %v2793 = vpop.f32.mrb[0].mxu0
    %v2794 = vadd.f32 0.0, %v2793
    %v2795 = vpop.f32.mrb[0].mxu0
    %v2796 = vpop.f32.mrb[0].mxu0
    %v2797 = vadd.f32 0.0, %v2796
    %v2798 = vpop.f32.mrb[0].mxu0
    %2799 = vmatprep.mubr.bf16.mxu0 0
    %2800 = vmatmul.mubr.bf16.gmra.mrb[0].mxu0 %v2572
    %v2801 = vpop.f32.mrb[0].mxu0
    %v2802 = vadd.f32 0.0, %v2801
    %v2803 = vpop.f32.mrb[0].mxu0
    %v2804 = vpop.f32.mrb[0].mxu0
    %v2805 = vadd.f32 0.0, %v2804
    %v2806 = vpop.f32.mrb[0].mxu0
    %2807 = vmatprep.mubr.bf16.mxu0 0
    %2808 = vmatmul.mubr.bf16.gmra.mrb[0].mxu0 %v2575
    %v2809 = vpop.f32.mrb[0].mxu0
    %v2810 = vadd.f32 0.0, %v2809
    %v2811 = vpop.f32.mrb[0].mxu0
    %v2812 = vpop.f32.mrb[0].mxu0
    %v2813 = vadd.f32 0.0, %v2812
    %v2814 = vpop.f32.mrb[0].mxu0
    %2815 = vmatprep.mubr.bf16.mxu0 0
    %2816 = vmatmul.mubr.bf16.gmra.mrb[0].mxu0 %v2578
    %v2817 = vpop.f32.mrb[0].mxu0
    %v2818 = vadd.f32 0.0, %v2817
    %v2819 = vpop.f32.mrb[0].mxu0
    %v2820 = vpop.f32.mrb[0].mxu0
    %v2821 = vadd.f32 0.0, %v2820
    %v2822 = vpop.f32.mrb[0].mxu0
    %2823 = vmatprep.mubr.bf16.mxu0 0
    %2824 = vmatmul.mubr.bf16.gmra.mrb[0].mxu0 %v2581
    %v2825 = vpop.f32.mrb[0].mxu0
    %v2826 = vadd.f32 0.0, %v2825
    %v2827 = vpop.f32.mrb[0].mxu0
    %v2828 = vpop.f32.mrb[0].mxu0
    %v2829 = vadd.f32 0.0, %v2828
    %v2830 = vpop.f32.mrb[0].mxu0
    %2831 = vmatprep.mubr.bf16.mxu0 0
    %2832 = vmatmul.mubr.bf16.gmra.mrb[0].mxu0 %v2584
    %v2833 = vpop.f32.mrb[0].mxu0
    %v2834 = vadd.f32 0.0, %v2833
    %v2835 = vpop.f32.mrb[0].mxu0
    %v2836 = vpop.f32.mrb[0].mxu0
    %v2837 = vadd.f32 0.0, %v2836
    %v2838 = vpop.f32.mrb[0].mxu0
    %2839 = vmatprep.mubr.bf16.mxu0 0
    %2840 = vmatmul.mubr.bf16.gmra.mrb[0].mxu0 %v2587
    %v2841 = vpop.f32.mrb[0].mxu0
    %v2842 = vadd.f32 0.0, %v2841
    %v2843 = vpop.f32.mrb[0].mxu0
    %v2844 = vpop.f32.mrb[0].mxu0
    %v2845 = vadd.f32 0.0, %v2844
    %v2846 = vpop.f32.mrb[0].mxu0
    %2847 = vmatprep.mubr.bf16.mxu0 0
    %2848 = vmatmul.mubr.bf16.gmra.mrb[0].mxu0 %v2590
    %v2849 = vpop.f32.mrb[0].mxu0
    %v2850 = vadd.f32 0.0, %v2849
    %v2851 = vpop.f32.mrb[0].mxu0
    %v2852 = vpop.f32.mrb[0].mxu0
    %v2853 = vadd.f32 0.0, %v2852
    %v2854 = vpop.f32.mrb[0].mxu0
    %2855 = vmatprep.mubr.bf16.mxu0 0
    %2856 = vmatmul.mubr.bf16.gmra.mrb[0].mxu0 %v2593
    %v2857 = vpop.f32.mrb[0].mxu0
    %v2858 = vadd.f32 0.0, %v2857
    %v2859 = vpop.f32.mrb[0].mxu0
    %v2860 = vpop.f32.mrb[0].mxu0
    %v2861 = vadd.f32 0.0, %v2860
    %v2862 = vpop.f32.mrb[0].mxu0
    %2863 = vmatprep.mubr.bf16.mxu0 0
    %2864 = vmatmul.mubr.bf16.gmra.mrb[0].mxu0 %v2596
    %v2865 = vpop.f32.mrb[0].mxu0
    %v2866 = vadd.f32 0.0, %v2865
    %v2867 = vpop.f32.mrb[0].mxu0
    %v2868 = vpop.f32.mrb[0].mxu0
    %v2869 = vadd.f32 0.0, %v2868
    %v2870 = vpop.f32.mrb[0].mxu0
    %2871 = vmatprep.mubr.bf16.mxu0 0
    %2872 = vmatmul.mubr.bf16.gmra.mrb[0].mxu0 %v2599
    %v2873 = vpop.f32.mrb[0].mxu0
    %v2874 = vadd.f32 0.0, %v2873
    %v2875 = vpop.f32.mrb[0].mxu0
    %v2876 = vpop.f32.mrb[0].mxu0
    %v2877 = vadd.f32 0.0, %v2876
    %v2878 = vpop.f32.mrb[0].mxu0
    %2879 = vmatprep.mubr.bf16.mxu0 0
    %2880 = vmatmul.mubr.bf16.gmra.mrb[0].mxu0 %v2602
    %v2881 = vpop.f32.mrb[0].mxu0
    %v2882 = vadd.f32 0.0, %v2881
    %v2883 = vpop.f32.mrb[0].mxu0
    %v2884 = vpop.f32.mrb[0].mxu0
    %v2885 = vadd.f32 0.0, %v2884
    %v2886 = vpop.f32.mrb[0].mxu0
    %2887 = vmatprep.mubr.bf16.mxu0 0
    %2888 = vmatmul.mubr.bf16.gmra.mrb[0].mxu0 %v2605
    %v2889 = vpop.f32.mrb[0].mxu0
    %v2890 = vadd.f32 0.0, %v2889
    %v2891 = vpop.f32.mrb[0].mxu0
    %v2892 = vpop.f32.mrb[0].mxu0
    %v2893 = vadd.f32 0.0, %v2892
    %v2894 = vpop.f32.mrb[0].mxu0
    %2895 = vdwg.mxu0
    %v2896 = vmax.f32 %v2642, 0.0
    %v2897 = vmax.f32 %v2645, 0.0
    %v2898 = vmax.f32 %v2650, 0.0
    %v2899 = vmax.f32 %v2653, 0.0
    %v2900 = vmax.f32 %v2658, 0.0
    %v2901 = vmax.f32 %v2661, 0.0
    %v2902 = vmax.f32 %v2666, 0.0
    %v2903 = vmax.f32 %v2669, 0.0
    %v2904 = vmax.f32 %v2674, 0.0
    %v2905 = vmax.f32 %v2677, 0.0
    %v2906 = vmax.f32 %v2682, 0.0
    %v2907 = vmax.f32 %v2685, 0.0
    %v2908 = vmax.f32 %v2690, 0.0
    %v2909 = vmax.f32 %v2693, 0.0
    %v2910 = vmax.f32 %v2698, 0.0
    %v2911 = vmax.f32 %v2701, 0.0
    %v2912 = vmax.f32 %v2706, 0.0
    %v2913 = vmax.f32 %v2709, 0.0
    %v2914 = vmax.f32 %v2714, 0.0
    %v2915 = vmax.f32 %v2717, 0.0
    %v2916 = vmax.f32 %v2722, 0.0
    %v2917 = vmax.f32 %v2725, 0.0
    %v2918 = vmax.f32 %v2730, 0.0
    %v2919 = vmax.f32 %v2733, 0.0
    %v2920 = vmax.f32 %v2738, 0.0
    %v2921 = vmax.f32 %v2741, 0.0
    %v2922 = vmax.f32 %v2746, 0.0
    %v2923 = vmax.f32 %v2749, 0.0
    %v2924 = vmax.f32 %v2754, 0.0
    %v2925 = vmax.f32 %v2757, 0.0
    %v2926 = vmax.f32 %v2762, 0.0
    %v2927 = vmax.f32 %v2765, 0.0
    %v2928 = vmax.f32 %v2770, 0.0
    %v2929 = vmax.f32 %v2773, 0.0
    %v2930 = vmax.f32 %v2778, 0.0
    %v2931 = vmax.f32 %v2781, 0.0
    %v2932 = vmax.f32 %v2786, 0.0
    %v2933 = vmax.f32 %v2789, 0.0
    %v2934 = vmax.f32 %v2794, 0.0
    %v2935 = vmax.f32 %v2797, 0.0
    %v2936 = vmax.f32 %v2802, 0.0
    %v2937 = vmax.f32 %v2805, 0.0
    %v2938 = vmax.f32 %v2810, 0.0
    %v2939 = vmax.f32 %v2813, 0.0
    %v2940 = vmax.f32 %v2818, 0.0
    %v2941 = vmax.f32 %v2821, 0.0
    %v2942 = vmax.f32 %v2826, 0.0
    %v2943 = vmax.f32 %v2829, 0.0
    %v2944 = vmax.f32 %v2834, 0.0
    %v2945 = vmax.f32 %v2837, 0.0
    %v2946 = vmax.f32 %v2842, 0.0
    %v2947 = vmax.f32 %v2845, 0.0
    %v2948 = vmax.f32 %v2850, 0.0
    %v2949 = vmax.f32 %v2853, 0.0
    %v2950 = vmax.f32 %v2858, 0.0
    %v2951 = vmax.f32 %v2861, 0.0
    %v2952 = vmax.f32 %v2866, 0.0
    %v2953 = vmax.f32 %v2869, 0.0
    %v2954 = vmax.f32 %v2874, 0.0
    %v2955 = vmax.f32 %v2877, 0.0
    %v2956 = vmax.f32 %v2882, 0.0
    %v2957 = vmax.f32 %v2885, 0.0
    %v2958 = vmax.f32 %v2890, 0.0
    %v2959 = vmax.f32 %v2893, 0.0
    %v2960 = vld [vmem:[%s1] sm:$0xf]
    %v2961 = vpack.c.bf16 %v2897, %v2896
    %v2962 = vpack.c.bf16 %v2899, %v2898
    %v2963 = vpack.c.bf16 %v2901, %v2900
    %v2964 = vpack.c.bf16 %v2903, %v2902
    %v2965 = vpack.c.bf16 %v2905, %v2904
    %v2966 = vpack.c.bf16 %v2907, %v2906
    %v2967 = vpack.c.bf16 %v2909, %v2908
    %v2968 = vpack.c.bf16 %v2911, %v2910
    %v2969 = vpack.c.bf16 %v2913, %v2912
    %v2970 = vpack.c.bf16 %v2915, %v2914
    %v2971 = vpack.c.bf16 %v2917, %v2916
    %v2972 = vpack.c.bf16 %v2919, %v2918
    %v2973 = vpack.c.bf16 %v2921, %v2920
    %v2974 = vpack.c.bf16 %v2923, %v2922
    %v2975 = vpack.c.bf16 %v2925, %v2924
    %v2976 = vpack.c.bf16 %v2927, %v2926
    %v2977 = vpack.c.bf16 %v2929, %v2928
    %v2978 = vpack.c.bf16 %v2931, %v2930
    %v2979 = vpack.c.bf16 %v2933, %v2932
    %v2980 = vpack.c.bf16 %v2935, %v2934
    %v2981 = vpack.c.bf16 %v2937, %v2936
    %v2982 = vpack.c.bf16 %v2939, %v2938
    %v2983 = vpack.c.bf16 %v2941, %v2940
    %v2984 = vpack.c.bf16 %v2943, %v2942
    %v2985 = vpack.c.bf16 %v2945, %v2944
    %v2986 = vpack.c.bf16 %v2947, %v2946
    %v2987 = vpack.c.bf16 %v2949, %v2948
    %v2988 = vpack.c.bf16 %v2951, %v2950
    %v2989 = vpack.c.bf16 %v2953, %v2952
    %v2990 = vpack.c.bf16 %v2955, %v2954
    %v2991 = vpack.c.bf16 %v2957, %v2956
    %v2992 = vpack.c.bf16 %v2959, %v2958
    %v2995 = vunpack.c.l.s4 1966171168
    %v2996 = vunpack.c.0.s8 %v2995
    %v2997 = vlaneseq
    %v2998 = vshrl.u32 %v2997, 7
    %v2999 = vsub.s32 %v2996, %v2998
    %v3000 = vrot.slane %v2960, %v2999
    %v3001 = vcombine.high %v3000, %v3000
    %v3003 = vunpack.c.l.s4 1966171168
    %v3004 = vunpack.c.0.s8 %v3003
    %v3005 = vlaneseq
    %v3006 = vshrl.u32 %v3005, 7
    %v3007 = vsub.s32 %v3004, %v3006
    %v3008 = vrot.slane %v3000, %v3007
    %v3010 = vunpack.c.l.s4 1966171168
    %v3011 = vunpack.c.0.s8 %v3010
    %v3012 = vlaneseq
    %v3013 = vshrl.u32 %v3012, 7
    %v3014 = vsub.s32 %v3011, %v3013
    %v3015 = vrot.slane %v3001, %v3014
    %v3016 = vcombine.high %v3008, %v3008
    %v3017 = vcombine.high %v3015, %v3015
    %3022 = vmatprep.subr.bf16.mxu0 0
    %3023 = vmatpush1.bf16.msra.mxu0 %v2961
    %3024 = vmatprep.subr.bf16.mxu0 0
    %3025 = vmatpush1.bf16.msra.mxu0 %v2962
    %3026 = vmatprep.subr.bf16.mxu0 0
    %3027 = vmatpush1.bf16.msra.mxu0 %v2963
    %3028 = vmatprep.subr.bf16.mxu0 0
    %3029 = vmatpush1.bf16.msra.mxu0 %v2964
    %3030 = vmatprep.subr.bf16.mxu0 0
    %3031 = vmatpush1.bf16.msra.mxu0 %v2965
    %3032 = vmatprep.subr.bf16.mxu0 0
    %3033 = vmatpush1.bf16.msra.mxu0 %v2966
    %3034 = vmatprep.subr.bf16.mxu0 0
    %3035 = vmatpush1.bf16.msra.mxu0 %v2967
    %3036 = vmatprep.subr.bf16.mxu0 0
    %3037 = vmatpush1.bf16.msra.mxu0 %v2968
    %3038 = vmatprep.subr.bf16.mxu0 0
    %3039 = vmatpush1.bf16.msra.mxu0 %v2969
    %3040 = vmatprep.subr.bf16.mxu0 0
    %3041 = vmatpush1.bf16.msra.mxu0 %v2970
    %3042 = vmatprep.subr.bf16.mxu0 0
    %3043 = vmatpush1.bf16.msra.mxu0 %v2971
    %3044 = vmatprep.subr.bf16.mxu0 0
    %3045 = vmatpush1.bf16.msra.mxu0 %v2972
    %3046 = vmatprep.subr.bf16.mxu0 0
    %3047 = vmatpush1.bf16.msra.mxu0 %v2973
    %3048 = vmatprep.subr.bf16.mxu0 0
    %3049 = vmatpush1.bf16.msra.mxu0 %v2974
    %3050 = vmatprep.subr.bf16.mxu0 0
    %3051 = vmatpush1.bf16.msra.mxu0 %v2975
    %3052 = vmatprep.subr.bf16.mxu0 0
    %3053 = vmatpush1.bf16.msra.mxu0 %v2976
    %3054 = vmatprep.mubr.bf16.mxu0 %v3015
    %3055 = vmatmul.mubr.bf16.gmra.mrb[0].mxu0 %v3008
    %v3056 = vpop.f32.mrb[0].mxu0
    %v3057 = vadd.f32 0.0, %v3056
    %v3058 = vpop.f32.mrb[0].mxu0
    %v3059 = vpop.f32.mrb[0].mxu0
    %v3060 = vpop.f32.mrb[0].mxu0
    %3061 = vdwg.mxu0
    %3062 = vmatprep.subr.bf16.mxu0 0
    %3063 = vmatpush1.bf16.msra.mxu0 %v2977
    %3064 = vmatprep.subr.bf16.mxu0 0
    %3065 = vmatpush1.bf16.msra.mxu0 %v2978
    %3066 = vmatprep.subr.bf16.mxu0 0
    %3067 = vmatpush1.bf16.msra.mxu0 %v2979
    %3068 = vmatprep.subr.bf16.mxu0 0
    %3069 = vmatpush1.bf16.msra.mxu0 %v2980
    %3070 = vmatprep.subr.bf16.mxu0 0
    %3071 = vmatpush1.bf16.msra.mxu0 %v2981
    %3072 = vmatprep.subr.bf16.mxu0 0
    %3073 = vmatpush1.bf16.msra.mxu0 %v2982
    %3074 = vmatprep.subr.bf16.mxu0 0
    %3075 = vmatpush1.bf16.msra.mxu0 %v2983
    %3076 = vmatprep.subr.bf16.mxu0 0
    %3077 = vmatpush1.bf16.msra.mxu0 %v2984
    %3078 = vmatprep.subr.bf16.mxu0 0
    %3079 = vmatpush1.bf16.msra.mxu0 %v2985
    %3080 = vmatprep.subr.bf16.mxu0 0
    %3081 = vmatpush1.bf16.msra.mxu0 %v2986
    %3082 = vmatprep.subr.bf16.mxu0 0
    %3083 = vmatpush1.bf16.msra.mxu0 %v2987
    %3084 = vmatprep.subr.bf16.mxu0 0
    %3085 = vmatpush1.bf16.msra.mxu0 %v2988
    %3086 = vmatprep.subr.bf16.mxu0 0
    %3087 = vmatpush1.bf16.msra.mxu0 %v2989
    %3088 = vmatprep.subr.bf16.mxu0 0
    %3089 = vmatpush1.bf16.msra.mxu0 %v2990
    %3090 = vmatprep.subr.bf16.mxu0 0
    %3091 = vmatpush1.bf16.msra.mxu0 %v2991
    %3092 = vmatprep.subr.bf16.mxu0 0
    %3093 = vmatpush1.bf16.msra.mxu0 %v2992
    %3094 = vmatprep.mubr.bf16.mxu0 %v3017
    %3095 = vmatmul.mubr.bf16.gmra.mrb[0].mxu0 %v3016
    %v3096 = vpop.f32.mrb[0].mxu0
    %v3097 = vadd.f32 %v3057, %v3096
    %v3098 = vpop.f32.mrb[0].mxu0
    %v3099 = vpop.f32.mrb[0].mxu0
    %v3100 = vpop.f32.mrb[0].mxu0
    %3101 = vdwg.mxu0
    %v3102 = vld [vmem:[%s2] sm:$0xff]
    %v3103 = vld [vmem:[%s2 + $0x8] sm:$0xff]
    %v3104 = vld [vmem:[%s2 + $0x10] sm:$0xff]
    %v3105 = vld [vmem:[%s2 + $0x18] sm:$0xff]
    %v3106 = vld [vmem:[%s2 + $0x20] sm:$0x1]
    %v3107 = vld [vmem:[%s2 + $0x21] sm:$0x1]
    %v3108 = vld [vmem:[%s2 + $0x22] sm:$0x1]
    %v3109 = vlaneseq
    %v3110 = vshrl.u32 %v3109, 7
    %v3111 = vsub.s32 0, %v3110
    %v3112 = vrot.slane %v3106, %v3111
    %v3114 = vsel %vm2510, %v3097, 0
    %3116 = vmatprep.subr.mxu0 0.0
    %3117 = vmatpush1.msra.mxu0 %v3102
    %3118 = vmatprep.subr.mxu0 0.0
    %3119 = vmatpush1.msra.mxu0 %v3103
    %3120 = vmatprep.subr.mxu0 0.0
    %3121 = vmatpush1.msra.mxu0 %v3104
    %3122 = vmatprep.subr.mxu0 0.0
    %3123 = vmatpush1.msra.mxu0 %v3105
    %3124 = vmatprep.subr.mxu0 0.0
    %3125 = vmatpush1.msra.mxu0 0.0
    %3126 = vmatprep.subr.mxu0 0.0
    %3127 = vmatpush1.msra.mxu0 0.0
    %3128 = vmatprep.subr.mxu0 0.0
    %3129 = vmatpush1.msra.mxu0 0.0
    %3130 = vmatprep.subr.mxu0 0.0
    %3131 = vmatpush1.msra.mxu0 0.0
    %3132 = vmatprep.subr.mxu0 0.0
    %3133 = vmatpush1.msra.mxu0 0.0
    %3134 = vmatprep.subr.mxu0 0.0
    %3135 = vmatpush1.msra.mxu0 0.0
    %3136 = vmatprep.subr.mxu0 0.0
    %3137 = vmatpush1.msra.mxu0 0.0
    %3138 = vmatprep.subr.mxu0 0.0
    %3139 = vmatpush1.msra.mxu0 0.0
    %3140 = vmatprep.subr.mxu0 0.0
    %3141 = vmatpush1.msra.mxu0 0.0
    %3142 = vmatprep.subr.mxu0 0.0
    %3143 = vmatpush1.msra.mxu0 0.0
    %3144 = vmatprep.subr.mxu0 0.0
    %3145 = vmatpush1.msra.mxu0 0.0
    %3146 = vmatprep.subr.mxu0 0.0
    %3147 = vmatpush1.msra.mxu0 0.0
    %3148 = vmatprep.subr.mxu0 0.0
    %3149 = vmatpush1.msra.mxu0 0.0
    %3150 = vmatprep.subr.mxu0 0.0
    %3151 = vmatpush1.msra.mxu0 0.0
    %3152 = vmatprep.subr.mxu0 0.0
    %3153 = vmatpush1.msra.mxu0 0.0
    %3154 = vmatprep.subr.mxu0 0.0
    %3155 = vmatpush1.msra.mxu0 0.0
    %3156 = vmatprep.subr.mxu0 0.0
    %3157 = vmatpush1.msra.mxu0 0.0
    %3158 = vmatprep.subr.mxu0 0.0
    %3159 = vmatpush1.msra.mxu0 0.0
    %3160 = vmatprep.subr.mxu0 0.0
    %3161 = vmatpush1.msra.mxu0 0.0
    %3162 = vmatprep.subr.mxu0 0.0
    %3163 = vmatpush1.msra.mxu0 0.0
    %3164 = vmatprep.subr.mxu0 0.0
    %3165 = vmatpush1.msra.mxu0 0.0
    %3166 = vmatprep.subr.mxu0 0.0
    %3167 = vmatpush1.msra.mxu0 0.0
    %3168 = vmatprep.subr.mxu0 0.0
    %3169 = vmatpush1.msra.mxu0 0.0
    %3170 = vmatprep.subr.mxu0 0.0
    %3171 = vmatpush1.msra.mxu0 0.0
    %3172 = vmatprep.subr.mxu0 0.0
    %3173 = vmatpush1.msra.mxu0 0.0
    %3174 = vmatprep.subr.mxu0 0.0
    %3175 = vmatpush1.msra.mxu0 0.0
    %3176 = vmatprep.subr.mxu0 0.0
    %3177 = vmatpush1.msra.mxu0 0.0
    %3178 = vmatprep.subr.mxu0 0.0
    %3179 = vmatpush1.msra.mxu0 0.0
    %3180 = vmatprep.mubr.f32.mxu0 0.0
    %3181 = vmatmul.mubr.f32.gmra.mrb[0].mxu0 %v3114
    %v3182 = vpop.f32.mrb[0].mxu0
    %v3183 = vadd.f32 %v3112, %v3182
    %v3184 = vpop.f32.mrb[0].mxu0
    %3185 = vdwg.mxu0
    %vm3186 = vcmask 517120
    %v3187 = vsel %vm3186, %v3183, 0.0
    %v3188 = vrot.slane %v3187, 4
    %v3189 = vadd.f32 %v3187, %v3188
    %v3190 = vrot.slane %v3189, 2
    %v3191 = vadd.f32 %v3189, %v3190
    %v3192 = vrot.slane %v3191, 1
    %v3193 = vadd.f32 %v3191, %v3192
    %v3194 = vrcp.pop 2.0
    %v3195 = vmul.f32 %v3193, %v3194
    %v3196 = vsub.f32 %v3183, %v3195
    %v3197 = vmul.f32 %v3196, %v3196
    %v3198 = vsel %vm3186, %v3197, 0.0
    %v3199 = vrot.slane %v3198, 4
    %v3200 = vadd.f32 %v3198, %v3199
    %v3201 = vrot.slane %v3200, 2
    %v3202 = vadd.f32 %v3200, %v3201
    %v3203 = vrot.slane %v3202, 1
    %v3204 = vadd.f32 %v3202, %v3203
    %v3205 = vmul.f32 %v3204, %v3194
    %v3206 = vadd.f32 %v3205, 1e-05
    %v3207 = vrsqrt.pop %v3206
    %v3208 = vmul.f32 %v3107, %v3207
    %v3209 = vmul.f32 %v3195, %v3208
    %v3210 = vsub.f32 %v3108, %v3209
    %v3211 = vlaneseq
    %v3212 = vshrl.u32 %v3211, 7
    %v3213 = vsub.s32 0, %v3212
    %v3214 = vrot.slane %v3208, %v3213
    %v3215 = vmul.f32 %v3183, %v3214
    %v3216 = vlaneseq
    %v3217 = vshrl.u32 %v3216, 7
    %v3218 = vsub.s32 0, %v3217
    %v3219 = vrot.slane %v3210, %v3218
    %v3220 = vadd.f32 %v3215, %v3219
    %v3221 = vmax.f32 %v3220, 0.0
    %v3222 = vpack.c.bf16 %v3221, %v3221
    %v3223 = vld [vmem:[%s0 + $0x10] sm:$0xf]
    %v3224 = vld [vmem:[%s0 + $0x14] sm:$0xf]
    %v3225 = vld [vmem:[%s0 + $0x18] sm:$0xf]
    %v3226 = vld [vmem:[%s0 + $0x1c] sm:$0xf]
    %v3227 = vld [vmem:[%s0 + $0x20] sm:$0xf]
    %v3228 = vld [vmem:[%s0 + $0x24] sm:$0xf]
    %v3229 = vld [vmem:[%s0 + $0x28] sm:$0xf]
    %v3230 = vld [vmem:[%s0 + $0x2c] sm:$0xf]
    %v3239 = vunpack.c.l.b16 %v3223
    %v3240 = vunpack.c.l.b16 %v3224
    %v3241 = vunpack.c.l.b16 %v3225
    %v3242 = vunpack.c.l.b16 %v3226
    %v3243 = vunpack.c.l.b16 %v3227
    %v3244 = vunpack.c.l.b16 %v3228
    %v3245 = vunpack.c.l.b16 %v3229
    %v3246 = vunpack.c.l.b16 %v3230
    %v3247 = vpack.c.b16 %v3240, %v3239
    %v3248 = vpack.c.b16 %v3242, %v3241
    %v3249 = vpack.c.b16 %v3244, %v3243
    %v3250 = vpack.c.b16 %v3246, %v3245
    %vm3255 = vcmask 523264
    %v3257 = vsel %vm3255, %v3222, 0
    %3259 = vmatprep.subr.bf16.mxu0 0
    %3260 = vmatpush1.bf16.msra.mxu0 %v3247
    %3261 = vmatprep.subr.bf16.mxu0 0
    %3262 = vmatpush1.bf16.msra.mxu0 %v3248
    %3263 = vmatprep.subr.bf16.mxu0 0
    %3264 = vmatpush1.bf16.msra.mxu0 %v3249
    %3265 = vmatprep.subr.bf16.mxu0 0
    %3266 = vmatpush1.bf16.msra.mxu0 %v3250
    %3267 = vmatprep.subr.bf16.mxu0 0
    %3268 = vmatpush1.bf16.msra.mxu0 0
    %3269 = vmatprep.subr.bf16.mxu0 0
    %3270 = vmatpush1.bf16.msra.mxu0 0
    %3271 = vmatprep.subr.bf16.mxu0 0
    %3272 = vmatpush1.bf16.msra.mxu0 0
    %3273 = vmatprep.subr.bf16.mxu0 0
    %3274 = vmatpush1.bf16.msra.mxu0 0
    %3275 = vmatprep.subr.bf16.mxu0 0
    %3276 = vmatpush1.bf16.msra.mxu0 0
    %3277 = vmatprep.subr.bf16.mxu0 0
    %3278 = vmatpush1.bf16.msra.mxu0 0
    %3279 = vmatprep.subr.bf16.mxu0 0
    %3280 = vmatpush1.bf16.msra.mxu0 0
    %3281 = vmatprep.subr.bf16.mxu0 0
    %3282 = vmatpush1.bf16.msra.mxu0 0
    %3283 = vmatprep.subr.bf16.mxu0 0
    %3284 = vmatpush1.bf16.msra.mxu0 0
    %3285 = vmatprep.subr.bf16.mxu0 0
    %3286 = vmatpush1.bf16.msra.mxu0 0
    %3287 = vmatprep.subr.bf16.mxu0 0
    %3288 = vmatpush1.bf16.msra.mxu0 0
    %3289 = vmatprep.subr.bf16.mxu0 0
    %3290 = vmatpush1.bf16.msra.mxu0 0
    %3291 = vmatprep.mubr.bf16.mxu0 0
    %3292 = vmatmul.mubr.bf16.gmra.mrb[0].mxu0 %v3257
    %v3293 = vpop.f32.mrb[0].mxu0
    %v3294 = vadd.f32 0.0, %v3293
    %v3295 = vpop.f32.mrb[0].mxu0
    %v3296 = vpop.f32.mrb[0].mxu0
    %v3297 = vpop.f32.mrb[0].mxu0
    %3298 = vdwg.mxu0
    %3300 = vrot.lane.b32.xlu0 %v3221, 32
    %v3301 = vpop.permute.xlu0 %3300
    %3304 = vrot.lane.b32.xlu0 %v3294, 96
    %v3305 = vpop.permute.xlu0 %3304
    %v3307 = vsel %vm2510, %v3097, %v3301
    %vm3308 = vcmask 785408
    %v3309 = vsel %vm3308, %v3307, %v3305
    %3310 = vst [vmem:[%s7] sm:$0x3] %v3309
    // Predicated region
    $region18: #{ssl_network_forward.2} parent=1 // pred_check
      _
    $region19: #{ssl_network_forward.2} parent=1 // pred_check_branch
      %3312 = sbr.rel (0) target = $region21
    $region20: #{ssl_network_forward.2} parent=1 // pred_region
      _
    $region21: #{ssl_network_forward.2} parent=1 // pred_fallthru
      _
    // Predicated region
    $region22: #{ssl_network_forward.2} parent=1 // pred_check
      _
    $region23: #{ssl_network_forward.2} parent=1 // pred_check_branch
      %3314 = sbr.rel (0) target = $region25
    $region24: #{ssl_network_forward.2} parent=1 // pred_region
      _
    $region25: #{ssl_network_forward.2} parent=1 // pred_fallthru
      _

</llo_original>
